<compile_context>
chip_gen: v6e
topology: v6e:2x2x1
jax: 0.10.0
libtpu: 0.0.40
codegen_flags: <defaults>
</compile_context>

<pallas_src>
import functools

import jax
import jax.numpy as jnp
from jax.experimental import pallas as pl
from jax.experimental.pallas import tpu as pltpu

LANE = 128          # TPU lane width; all channel / K dims are zero-padded to this
OUT_SUBLANES = 8    # pooled output padded to a full (8, 128) tile -> unmasked stores


# ---------------------------------------------------------------------------
# Fused Pallas kernel: conv-as-GEMM chain + ReLU + global average pool
# ---------------------------------------------------------------------------
def _fused_feature_kernel(x_ref, w_ref, b_ref, o_ref, *, num_layers, inv_hw):
    """One grid step = one batch element.

    x_ref: (HW, 128)      im2col patches for this image (K zero-padded to 128)
    w_ref: (L, 128, 128)  packed weights (layer 0 = 3x3 conv as GEMM, rest 1x1)
    b_ref: (L, 1, 128)    packed biases
    o_ref: (1, 8, 128)    pooled features, replicated across 8 sublanes (lane-dense)
    """
    y = x_ref[...]  # (HW, 128) f32; stays in VMEM/vregs for the whole chain

    # Statically unrolled layer chain: GEMM on the MXU, bias+ReLU on the VPU.
    for l in range(num_layers):
        acc = jnp.dot(y, w_ref[l], preferred_element_type=jnp.float32)
        y = jnp.maximum(acc + b_ref[l], 0.0)

    # AdaptiveAvgPool2d(1) fused into the epilogue: mean over the spatial rows.
    pooled = jnp.sum(y, axis=0, keepdims=True) * inv_hw            # (1, 128)
    o_ref[...] = jnp.broadcast_to(pooled, o_ref.shape).astype(o_ref.dtype)


# ---------------------------------------------------------------------------
# Glue: im2col patch extraction (layout plumbing, stays in plain JAX)
# ---------------------------------------------------------------------------
def im2col(x_nhwc, k=3, stride=2, pad=1):
    B, H, W, C = x_nhwc.shape
    xp = jnp.pad(x_nhwc, ((0, 0), (pad, pad), (pad, pad), (0, 0)))
    OH = (H + 2 * pad - k) // stride + 1
    OW = (W + 2 * pad - k) // stride + 1
    patches = []
    for di in range(k):
        for dj in range(k):
            patches.append(
                xp[:, di:di + stride * OH:stride, dj:dj + stride * OW:stride, :]
            )
    # (B, OH, OW, k*k, C) -> (B*OH*OW, k*k*C)   (ordering matches weight reshape below)
    patches = jnp.stack(patches, axis=-2)
    return patches.reshape(B * OH * OW, k * k * C), OH, OW


# ---------------------------------------------------------------------------
# Deterministic parameter construction (synthetic, no checkpoint load)
# ---------------------------------------------------------------------------
def init_params(key, in_channels=4, first_out=16,
                block_channels=(16, 16, 16, 24, 24, 24, 32, 32, 40)):
    keys = jax.random.split(key, 2 + 2 * len(block_channels))
    params = {}

    # first_conv weight in PyTorch layout (Cout, Cin, 3, 3) -> (3,3,Cin,Cout) -> (9*Cin, Cout)
    w0 = 0.1 * jax.random.normal(keys[0], (first_out, in_channels, 3, 3), jnp.float32)
    w0 = jnp.transpose(w0, (2, 3, 1, 0)).reshape(3 * 3 * in_channels, first_out)
    b0 = 0.01 * jax.random.normal(keys[1], (first_out,), jnp.float32)
    params["first_conv"] = (w0, b0)

    blocks = []
    cin = first_out
    for i, cout in enumerate(block_channels):
        w = 0.1 * jax.random.normal(keys[2 + 2 * i], (cin, cout), jnp.float32)
        b = 0.01 * jax.random.normal(keys[3 + 2 * i], (cout,), jnp.float32)
        blocks.append((w, b))
        cin = cout
    params["blocks"] = blocks
    return params


def pack_params(params):
    """Pack all layers into zero-padded (L,128,128) / (L,1,128) tensors.

    Zero padding of weight rows/cols and bias lanes guarantees the padded lanes
    remain exactly 0 through every ReLU, so the result sliced back to the real
    channel count is bit-identical to the unpadded computation.
    """
    layers = [params["first_conv"]] + list(params["blocks"])
    L = len(layers)
    w_packed = jnp.zeros((L, LANE, LANE), jnp.float32)
    b_packed = jnp.zeros((L, 1, LANE), jnp.float32)
    for i, (w, b) in enumerate(layers):
        w_packed = w_packed.at[i, :w.shape[0], :w.shape[1]].set(w)
        b_packed = b_packed.at[i, 0, :b.shape[0]].set(b)
    return w_packed, b_packed


# ---------------------------------------------------------------------------
# Forward pass (matches PartialModel.forward semantics)
# ---------------------------------------------------------------------------
def partial_model_forward(x_nchw, params):
    # NCHW (PyTorch) -> NHWC (kernel layout)
    x = jnp.transpose(x_nchw, (0, 2, 3, 1)).astype(jnp.float32)
    B = x.shape[0]

    # first_conv lowered to a GEMM over im2col patches; patches feed directly into
    # the single fused kernel (no further HBM round trips between layers).
    # TODO(synk): fold im2col itself into the kernel (9 shifted strided reads) if
    #             batch/resolution grow enough for the patch buffer to matter.
    patches, OH, OW = im2col(x, k=3, stride=2, pad=1)     # (B*OH*OW, 9*Cin)
    HW = OH * OW
    assert HW % 8 == 0, "spatial tile must be a multiple of 8 sublanes"
    K = patches.shape[1]
    patches = jnp.pad(patches, ((0, 0), (0, LANE - K)))    # lane-dense K dim

    w_packed, b_packed = pack_params(params)               # (L,128,128), (L,1,128)
    L = w_packed.shape[0]
    num_features = params["blocks"][-1][0].shape[1]

    kernel = functools.partial(_fused_feature_kernel, num_layers=L, inv_hw=1.0 / HW)
    out_padded = pl.pallas_call(
        kernel,
        out_shape=jax.ShapeDtypeStruct((B, OUT_SUBLANES, LANE), jnp.float32),
        grid=(B,),
        in_specs=[
            pl.BlockSpec((HW, LANE), lambda b: (b, 0)),            # this image's patches
            pl.BlockSpec((L, LANE, LANE), lambda b: (0, 0, 0)),    # all weights, one DMA
            pl.BlockSpec((L, 1, LANE), lambda b: (0, 0, 0)),       # all biases, one DMA
        ],
        out_specs=pl.BlockSpec((1, OUT_SUBLANES, LANE), lambda b: (b, 0, 0)),
        compiler_params=pltpu.CompilerParams(
            dimension_semantics=("parallel",)),                    # v7x: 2nd TC works too
    )(patches, w_packed, b_packed)

    # flatten + strip lane/sublane padding -> (B, num_features)
    return out_padded[:, 0, :num_features]


if __name__ == "__main__":
    key = jax.random.PRNGKey(0)
    pkey, xkey = jax.random.split(key)
    params = init_params(pkey, in_channels=4)

    # small NCHW input consistent with the PyTorch module's conv frontend
    x = jax.random.normal(xkey, (2, 4, 16, 16), jnp.float32)

    fwd = jax.jit(partial_model_forward)
    out = jax.block_until_ready(fwd(x, params))
    assert out.shape == (2, 40), out.shape
    print("KERNEL_OK")
</pallas_src>

<mosaic_0001>
module attributes {stable_mosaic.version = 11 : i64} {
  func.func @_fused_feature_kernel(%arg0: i32, %arg1: memref<64x128xf32, #tpu.memory_space<vmem>>, %arg2: memref<10x128x128xf32, #tpu.memory_space<vmem>>, %arg3: memref<10x1x128xf32, #tpu.memory_space<vmem>>, %arg4: memref<1x8x128xf32, #tpu.memory_space<vmem>>) attributes {dimension_semantics = [#tpu.dimension_semantics<parallel>], iteration_bounds = array<i64: 2>, scalar_prefetch = 0 : i64, scratch_operands = 0 : i64, tpu.core_type = #tpu.core_type<tc>, window_params = [{transform_indices = @transform_0, window_bounds = array<i64: 64, 128>}, {pipeline_mode = #tpu.pipeline_mode<synchronous>, transform_indices = @transform_1, window_bounds = array<i64: 10, 128, 128>}, {pipeline_mode = #tpu.pipeline_mode<synchronous>, transform_indices = @transform_2, window_bounds = array<i64: 10, 1, 128>}, {transform_indices = @transform_3, window_bounds = array<i64: 1, 8, 128>}]} {
    %c0 = arith.constant 0 : index
    %c0_0 = arith.constant 0 : index
    %0 = vector.load %arg1[%c0, %c0_0] : memref<64x128xf32, #tpu.memory_space<vmem>>, vector<64x128xf32>
    %c0_1 = arith.constant 0 : index
    %c0_2 = arith.constant 0 : index
    %c0_3 = arith.constant 0 : index
    %1 = vector.load %arg2[%c0_1, %c0_2, %c0_3] : memref<10x128x128xf32, #tpu.memory_space<vmem>>, vector<1x128x128xf32>
    %2 = vector.shape_cast %1 : vector<1x128x128xf32> to vector<128x128xf32>
    %cst = arith.constant dense<0.000000e+00> : vector<64x128xf32>
    %3 = tpu.matmul %0, %2, %cst {dimension_numbers = #tpu.dot_dimension_numbers<[1], [0], [0], [1], [0, 0, 1, 1], [], []>} : vector<64x128xf32>, vector<128x128xf32>, vector<64x128xf32> -> vector<64x128xf32>
    %c0_4 = arith.constant 0 : index
    %c0_5 = arith.constant 0 : index
    %c0_6 = arith.constant 0 : index
    %4 = vector.load %arg3[%c0_4, %c0_5, %c0_6] : memref<10x1x128xf32, #tpu.memory_space<vmem>>, vector<1x1x128xf32>
    %5 = vector.shape_cast %4 : vector<1x1x128xf32> to vector<1x128xf32>
    %6 = vector.broadcast %5 : vector<1x128xf32> to vector<64x128xf32>
    %7 = arith.addf %3, %6 : vector<64x128xf32>
    %cst_7 = arith.constant 0.000000e+00 : f32
    %8 = vector.broadcast %cst_7 : f32 to vector<64x128xf32>
    %9 = arith.maximumf %7, %8 : vector<64x128xf32>
    %c1 = arith.constant 1 : index
    %c0_8 = arith.constant 0 : index
    %c0_9 = arith.constant 0 : index
    %10 = vector.load %arg2[%c1, %c0_8, %c0_9] : memref<10x128x128xf32, #tpu.memory_space<vmem>>, vector<1x128x128xf32>
    %11 = vector.shape_cast %10 : vector<1x128x128xf32> to vector<128x128xf32>
    %cst_10 = arith.constant dense<0.000000e+00> : vector<64x128xf32>
    %12 = tpu.matmul %9, %11, %cst_10 {dimension_numbers = #tpu.dot_dimension_numbers<[1], [0], [0], [1], [0, 0, 1, 1], [], []>} : vector<64x128xf32>, vector<128x128xf32>, vector<64x128xf32> -> vector<64x128xf32>
    %c1_11 = arith.constant 1 : index
    %c0_12 = arith.constant 0 : index
    %c0_13 = arith.constant 0 : index
    %13 = vector.load %arg3[%c1_11, %c0_12, %c0_13] : memref<10x1x128xf32, #tpu.memory_space<vmem>>, vector<1x1x128xf32>
    %14 = vector.shape_cast %13 : vector<1x1x128xf32> to vector<1x128xf32>
    %15 = vector.broadcast %14 : vector<1x128xf32> to vector<64x128xf32>
    %16 = arith.addf %12, %15 : vector<64x128xf32>
    %cst_14 = arith.constant 0.000000e+00 : f32
    %17 = vector.broadcast %cst_14 : f32 to vector<64x128xf32>
    %18 = arith.maximumf %16, %17 : vector<64x128xf32>
    %c2 = arith.constant 2 : index
    %c0_15 = arith.constant 0 : index
    %c0_16 = arith.constant 0 : index
    %19 = vector.load %arg2[%c2, %c0_15, %c0_16] : memref<10x128x128xf32, #tpu.memory_space<vmem>>, vector<1x128x128xf32>
    %20 = vector.shape_cast %19 : vector<1x128x128xf32> to vector<128x128xf32>
    %cst_17 = arith.constant dense<0.000000e+00> : vector<64x128xf32>
    %21 = tpu.matmul %18, %20, %cst_17 {dimension_numbers = #tpu.dot_dimension_numbers<[1], [0], [0], [1], [0, 0, 1, 1], [], []>} : vector<64x128xf32>, vector<128x128xf32>, vector<64x128xf32> -> vector<64x128xf32>
    %c2_18 = arith.constant 2 : index
    %c0_19 = arith.constant 0 : index
    %c0_20 = arith.constant 0 : index
    %22 = vector.load %arg3[%c2_18, %c0_19, %c0_20] : memref<10x1x128xf32, #tpu.memory_space<vmem>>, vector<1x1x128xf32>
    %23 = vector.shape_cast %22 : vector<1x1x128xf32> to vector<1x128xf32>
    %24 = vector.broadcast %23 : vector<1x128xf32> to vector<64x128xf32>
    %25 = arith.addf %21, %24 : vector<64x128xf32>
    %cst_21 = arith.constant 0.000000e+00 : f32
    %26 = vector.broadcast %cst_21 : f32 to vector<64x128xf32>
    %27 = arith.maximumf %25, %26 : vector<64x128xf32>
    %c3 = arith.constant 3 : index
    %c0_22 = arith.constant 0 : index
    %c0_23 = arith.constant 0 : index
    %28 = vector.load %arg2[%c3, %c0_22, %c0_23] : memref<10x128x128xf32, #tpu.memory_space<vmem>>, vector<1x128x128xf32>
    %29 = vector.shape_cast %28 : vector<1x128x128xf32> to vector<128x128xf32>
    %cst_24 = arith.constant dense<0.000000e+00> : vector<64x128xf32>
    %30 = tpu.matmul %27, %29, %cst_24 {dimension_numbers = #tpu.dot_dimension_numbers<[1], [0], [0], [1], [0, 0, 1, 1], [], []>} : vector<64x128xf32>, vector<128x128xf32>, vector<64x128xf32> -> vector<64x128xf32>
    %c3_25 = arith.constant 3 : index
    %c0_26 = arith.constant 0 : index
    %c0_27 = arith.constant 0 : index
    %31 = vector.load %arg3[%c3_25, %c0_26, %c0_27] : memref<10x1x128xf32, #tpu.memory_space<vmem>>, vector<1x1x128xf32>
    %32 = vector.shape_cast %31 : vector<1x1x128xf32> to vector<1x128xf32>
    %33 = vector.broadcast %32 : vector<1x128xf32> to vector<64x128xf32>
    %34 = arith.addf %30, %33 : vector<64x128xf32>
    %cst_28 = arith.constant 0.000000e+00 : f32
    %35 = vector.broadcast %cst_28 : f32 to vector<64x128xf32>
    %36 = arith.maximumf %34, %35 : vector<64x128xf32>
    %c4 = arith.constant 4 : index
    %c0_29 = arith.constant 0 : index
    %c0_30 = arith.constant 0 : index
    %37 = vector.load %arg2[%c4, %c0_29, %c0_30] : memref<10x128x128xf32, #tpu.memory_space<vmem>>, vector<1x128x128xf32>
    %38 = vector.shape_cast %37 : vector<1x128x128xf32> to vector<128x128xf32>
    %cst_31 = arith.constant dense<0.000000e+00> : vector<64x128xf32>
    %39 = tpu.matmul %36, %38, %cst_31 {dimension_numbers = #tpu.dot_dimension_numbers<[1], [0], [0], [1], [0, 0, 1, 1], [], []>} : vector<64x128xf32>, vector<128x128xf32>, vector<64x128xf32> -> vector<64x128xf32>
    %c4_32 = arith.constant 4 : index
    %c0_33 = arith.constant 0 : index
    %c0_34 = arith.constant 0 : index
    %40 = vector.load %arg3[%c4_32, %c0_33, %c0_34] : memref<10x1x128xf32, #tpu.memory_space<vmem>>, vector<1x1x128xf32>
    %41 = vector.shape_cast %40 : vector<1x1x128xf32> to vector<1x128xf32>
    %42 = vector.broadcast %41 : vector<1x128xf32> to vector<64x128xf32>
    %43 = arith.addf %39, %42 : vector<64x128xf32>
    %cst_35 = arith.constant 0.000000e+00 : f32
    %44 = vector.broadcast %cst_35 : f32 to vector<64x128xf32>
    %45 = arith.maximumf %43, %44 : vector<64x128xf32>
    %c5 = arith.constant 5 : index
    %c0_36 = arith.constant 0 : index
    %c0_37 = arith.constant 0 : index
    %46 = vector.load %arg2[%c5, %c0_36, %c0_37] : memref<10x128x128xf32, #tpu.memory_space<vmem>>, vector<1x128x128xf32>
    %47 = vector.shape_cast %46 : vector<1x128x128xf32> to vector<128x128xf32>
    %cst_38 = arith.constant dense<0.000000e+00> : vector<64x128xf32>
    %48 = tpu.matmul %45, %47, %cst_38 {dimension_numbers = #tpu.dot_dimension_numbers<[1], [0], [0], [1], [0, 0, 1, 1], [], []>} : vector<64x128xf32>, vector<128x128xf32>, vector<64x128xf32> -> vector<64x128xf32>
    %c5_39 = arith.constant 5 : index
    %c0_40 = arith.constant 0 : index
    %c0_41 = arith.constant 0 : index
    %49 = vector.load %arg3[%c5_39, %c0_40, %c0_41] : memref<10x1x128xf32, #tpu.memory_space<vmem>>, vector<1x1x128xf32>
    %50 = vector.shape_cast %49 : vector<1x1x128xf32> to vector<1x128xf32>
    %51 = vector.broadcast %50 : vector<1x128xf32> to vector<64x128xf32>
    %52 = arith.addf %48, %51 : vector<64x128xf32>
    %cst_42 = arith.constant 0.000000e+00 : f32
    %53 = vector.broadcast %cst_42 : f32 to vector<64x128xf32>
    %54 = arith.maximumf %52, %53 : vector<64x128xf32>
    %c6 = arith.constant 6 : index
    %c0_43 = arith.constant 0 : index
    %c0_44 = arith.constant 0 : index
    %55 = vector.load %arg2[%c6, %c0_43, %c0_44] : memref<10x128x128xf32, #tpu.memory_space<vmem>>, vector<1x128x128xf32>
    %56 = vector.shape_cast %55 : vector<1x128x128xf32> to vector<128x128xf32>
    %cst_45 = arith.constant dense<0.000000e+00> : vector<64x128xf32>
    %57 = tpu.matmul %54, %56, %cst_45 {dimension_numbers = #tpu.dot_dimension_numbers<[1], [0], [0], [1], [0, 0, 1, 1], [], []>} : vector<64x128xf32>, vector<128x128xf32>, vector<64x128xf32> -> vector<64x128xf32>
    %c6_46 = arith.constant 6 : index
    %c0_47 = arith.constant 0 : index
    %c0_48 = arith.constant 0 : index
    %58 = vector.load %arg3[%c6_46, %c0_47, %c0_48] : memref<10x1x128xf32, #tpu.memory_space<vmem>>, vector<1x1x128xf32>
    %59 = vector.shape_cast %58 : vector<1x1x128xf32> to vector<1x128xf32>
    %60 = vector.broadcast %59 : vector<1x128xf32> to vector<64x128xf32>
    %61 = arith.addf %57, %60 : vector<64x128xf32>
    %cst_49 = arith.constant 0.000000e+00 : f32
    %62 = vector.broadcast %cst_49 : f32 to vector<64x128xf32>
    %63 = arith.maximumf %61, %62 : vector<64x128xf32>
    %c7 = arith.constant 7 : index
    %c0_50 = arith.constant 0 : index
    %c0_51 = arith.constant 0 : index
    %64 = vector.load %arg2[%c7, %c0_50, %c0_51] : memref<10x128x128xf32, #tpu.memory_space<vmem>>, vector<1x128x128xf32>
    %65 = vector.shape_cast %64 : vector<1x128x128xf32> to vector<128x128xf32>
    %cst_52 = arith.constant dense<0.000000e+00> : vector<64x128xf32>
    %66 = tpu.matmul %63, %65, %cst_52 {dimension_numbers = #tpu.dot_dimension_numbers<[1], [0], [0], [1], [0, 0, 1, 1], [], []>} : vector<64x128xf32>, vector<128x128xf32>, vector<64x128xf32> -> vector<64x128xf32>
    %c7_53 = arith.constant 7 : index
    %c0_54 = arith.constant 0 : index
    %c0_55 = arith.constant 0 : index
    %67 = vector.load %arg3[%c7_53, %c0_54, %c0_55] : memref<10x1x128xf32, #tpu.memory_space<vmem>>, vector<1x1x128xf32>
    %68 = vector.shape_cast %67 : vector<1x1x128xf32> to vector<1x128xf32>
    %69 = vector.broadcast %68 : vector<1x128xf32> to vector<64x128xf32>
    %70 = arith.addf %66, %69 : vector<64x128xf32>
    %cst_56 = arith.constant 0.000000e+00 : f32
    %71 = vector.broadcast %cst_56 : f32 to vector<64x128xf32>
    %72 = arith.maximumf %70, %71 : vector<64x128xf32>
    %c8 = arith.constant 8 : index
    %c0_57 = arith.constant 0 : index
    %c0_58 = arith.constant 0 : index
    %73 = vector.load %arg2[%c8, %c0_57, %c0_58] : memref<10x128x128xf32, #tpu.memory_space<vmem>>, vector<1x128x128xf32>
    %74 = vector.shape_cast %73 : vector<1x128x128xf32> to vector<128x128xf32>
    %cst_59 = arith.constant dense<0.000000e+00> : vector<64x128xf32>
    %75 = tpu.matmul %72, %74, %cst_59 {dimension_numbers = #tpu.dot_dimension_numbers<[1], [0], [0], [1], [0, 0, 1, 1], [], []>} : vector<64x128xf32>, vector<128x128xf32>, vector<64x128xf32> -> vector<64x128xf32>
    %c8_60 = arith.constant 8 : index
    %c0_61 = arith.constant 0 : index
    %c0_62 = arith.constant 0 : index
    %76 = vector.load %arg3[%c8_60, %c0_61, %c0_62] : memref<10x1x128xf32, #tpu.memory_space<vmem>>, vector<1x1x128xf32>
    %77 = vector.shape_cast %76 : vector<1x1x128xf32> to vector<1x128xf32>
    %78 = vector.broadcast %77 : vector<1x128xf32> to vector<64x128xf32>
    %79 = arith.addf %75, %78 : vector<64x128xf32>
    %cst_63 = arith.constant 0.000000e+00 : f32
    %80 = vector.broadcast %cst_63 : f32 to vector<64x128xf32>
    %81 = arith.maximumf %79, %80 : vector<64x128xf32>
    %c9 = arith.constant 9 : index
    %c0_64 = arith.constant 0 : index
    %c0_65 = arith.constant 0 : index
    %82 = vector.load %arg2[%c9, %c0_64, %c0_65] : memref<10x128x128xf32, #tpu.memory_space<vmem>>, vector<1x128x128xf32>
    %83 = vector.shape_cast %82 : vector<1x128x128xf32> to vector<128x128xf32>
    %cst_66 = arith.constant dense<0.000000e+00> : vector<64x128xf32>
    %84 = tpu.matmul %81, %83, %cst_66 {dimension_numbers = #tpu.dot_dimension_numbers<[1], [0], [0], [1], [0, 0, 1, 1], [], []>} : vector<64x128xf32>, vector<128x128xf32>, vector<64x128xf32> -> vector<64x128xf32>
    %c9_67 = arith.constant 9 : index
    %c0_68 = arith.constant 0 : index
    %c0_69 = arith.constant 0 : index
    %85 = vector.load %arg3[%c9_67, %c0_68, %c0_69] : memref<10x1x128xf32, #tpu.memory_space<vmem>>, vector<1x1x128xf32>
    %86 = vector.shape_cast %85 : vector<1x1x128xf32> to vector<1x128xf32>
    %87 = vector.broadcast %86 : vector<1x128xf32> to vector<64x128xf32>
    %88 = arith.addf %84, %87 : vector<64x128xf32>
    %cst_70 = arith.constant 0.000000e+00 : f32
    %89 = vector.broadcast %cst_70 : f32 to vector<64x128xf32>
    %90 = arith.maximumf %88, %89 : vector<64x128xf32>
    %cst_71 = arith.constant dense<0.000000e+00> : vector<128xf32>
    %91 = vector.multi_reduction <add>, %90, %cst_71 [0] : vector<64x128xf32> to vector<128xf32>
    %92 = vector.shape_cast %91 : vector<128xf32> to vector<1x128xf32>
    %cst_72 = arith.constant 1.562500e-02 : f32
    %93 = vector.broadcast %cst_72 : f32 to vector<1x128xf32>
    %94 = arith.mulf %92, %93 : vector<1x128xf32>
    %95 = vector.shape_cast %94 : vector<1x128xf32> to vector<1x1x128xf32>
    %96 = vector.broadcast %95 : vector<1x1x128xf32> to vector<1x8x128xf32>
    %c0_73 = arith.constant 0 : index
    %c0_74 = arith.constant 0 : index
    %c0_75 = arith.constant 0 : index
    %97 = vector.load %arg4[%c0_73, %c0_74, %c0_75] : memref<1x8x128xf32, #tpu.memory_space<vmem>>, vector<1x8x128xf32>
    tpu.vector_store %arg4[%c0_73, %c0_74, %c0_75], %96 {strides = array<i32>} : memref<1x8x128xf32, #tpu.memory_space<vmem>>, vector<1x8x128xf32>,
    return
  }
  func.func @transform_0(%arg0: i32) -> (i32, i32) {
    %c0_i32 = arith.constant 0 : i32
    %c0_i32_0 = arith.constant 0 : i32
    return %arg0, %c0_i32 : i32, i32
  }
  func.func @transform_1(%arg0: i32) -> (i32, i32, i32) {
    %c0_i32 = arith.constant 0 : i32
    %c0_i32_0 = arith.constant 0 : i32
    %c0_i32_1 = arith.constant 0 : i32
    %c0_i32_2 = arith.constant 0 : i32
    return %c0_i32, %c0_i32_0, %c0_i32_1 : i32, i32, i32
  }
  func.func @transform_2(%arg0: i32) -> (i32, i32, i32) {
    %c0_i32 = arith.constant 0 : i32
    %c0_i32_0 = arith.constant 0 : i32
    %c0_i32_1 = arith.constant 0 : i32
    %c0_i32_2 = arith.constant 0 : i32
    return %c0_i32, %c0_i32_0, %c0_i32_1 : i32, i32, i32
  }
  func.func @transform_3(%arg0: i32) -> (i32, i32, i32) {
    %c0_i32 = arith.constant 0 : i32
    %c0_i32_0 = arith.constant 0 : i32
    %c0_i32_1 = arith.constant 0 : i32
    return %arg0, %c0_i32, %c0_i32_0 : i32, i32, i32
  }
}

</mosaic_0001>

<llo_original>
// kernel: partial_model_forward.1
$region0: #{partial_model_forward.1}
  #allocation0 [shape = 'u32[]', space=smem, size = 0x4, offset = 0x4, fixed_abs, tag = 'smem constant byte address 0x4 - core index']
  #allocation1 [shape = 'u32[144,128]{1,0:T(1,128)}', space=vmem, size = 0x12000, scoped, tag = 'internal scratch']
  %s0 = inlined_call_operand.vmem [shape: f32[128,128], index: 0, kind: input, shape index: {}]
  %s1 = inlined_call_operand.vmem [shape: f32[10,128,128], index: 1, kind: input, shape index: {}]
  %s2 = inlined_call_operand.vmem [shape: f32[10,1,128], index: 2, kind: input, shape index: {}]
  %s3 = inlined_call_operand.vmem [shape: f32[2,8,128], index: 3, kind: output, shape index: {}]
  %s4 = sld [smem:[#allocation0]]
  $region45: #{partial_model_forward.1} parent=0
    _
  %s6 = ssub.s32 1, %s4
  %s7 = scalar_select 0, %s6, %s4
  loop: start=0, step=1, limit=4
  $region2: #{partial_model_forward.1} parent=0 // loop_pre_header
    _
  $region3: #{partial_model_forward.1} parent=0 // loop_header
    %s9 = sphi 0, %s13
    %p10 = scmp.ge.s32.totalorder %s9, 4
    %s19 = sphi 0, %s21
    %s22 = sphi 0, %s19
    %s23 = sphi 0, %s22
    %s39 = sphi 0, %s23
    %s43 = sphi 0, %s43
    %s45 = sphi 0, %s43
    %s46 = sphi 0, %s45
    %s60 = sphi 0, %s46
    %s64 = sphi 0, %s64
    %s66 = sphi 0, %s64
    %s67 = sphi 0, %s66
    %s81 = sphi 0, %s67
    %s87 = sphi 0, %s89
    %s90 = sphi 0, %s87
    %s91 = sphi 0, %s90
    %s107 = sphi 0, %s91
  $region4: #{partial_model_forward.1} parent=0 // loop_header_branch
    %12 = sbr.rel (%p10) target = $region8
  $region5: #{partial_model_forward.1} parent=0 // loop_body
    %s14 = ssub.s32 %s9, 1
    %s15 = ssub.s32 %s9, 2
    %s16 = sadd.s32 %s9, 1
    %s17 = ssub.s32 %s9, %s16
    %p18 = scmp.eq.s32.totalorder %s17, 0
    %s20 = sadd.s32 %s19, 1
    %s21 = scalar_select %p18, %s19, %s20
    %p24 = pneg %p18
    %p25 = scmp.eq.s32.totalorder %s9, 1
    %p26 = por %p24, %p25
    %p27 = scmp.ne.s32.totalorder %s19, %s22
    %p28 = scmp.eq.s32.totalorder %s9, 0
    %p29 = por %p27, %p28
    %p30 = scmp.ne.s32.totalorder %s19, %s22
    %p31 = scmp.eq.s32.totalorder %s14, 1
    %p32 = por %p30, %p31
    %p33 = scmp.ne.s32.totalorder %s22, %s23
    %p34 = scmp.eq.s32.totalorder %s14, 0
    %p35 = por %p33, %p34
    %p36 = scmp.ne.s32.totalorder %s22, %s23
    %p37 = scmp.eq.s32.totalorder %s15, 1
    %p38 = por %p36, %p37
    %p40 = scmp.ne.s32.totalorder %s23, %s39
    %p41 = scmp.eq.s32.totalorder %s15, 0
    %p42 = por %p40, %p41
    %s44 = sadd.s32 %s43, 1
    %p47 = scmp.eq.s32.totalorder %s9, 1
    %p48 = scmp.ne.s32.totalorder %s43, %s45
    %p49 = scmp.eq.s32.totalorder %s9, 0
    %p50 = por %p48, %p49
    %p51 = scmp.ne.s32.totalorder %s43, %s45
    %p52 = scmp.eq.s32.totalorder %s14, 1
    %p53 = por %p51, %p52
    %p54 = scmp.ne.s32.totalorder %s45, %s46
    %p55 = scmp.eq.s32.totalorder %s14, 0
    %p56 = por %p54, %p55
    %p57 = scmp.ne.s32.totalorder %s45, %s46
    %p58 = scmp.eq.s32.totalorder %s15, 1
    %p59 = por %p57, %p58
    %p61 = scmp.ne.s32.totalorder %s46, %s60
    %p62 = scmp.eq.s32.totalorder %s15, 0
    %p63 = por %p61, %p62
    %s65 = sadd.s32 %s64, 1
    %p68 = scmp.eq.s32.totalorder %s9, 1
    %p69 = scmp.ne.s32.totalorder %s64, %s66
    %p70 = scmp.eq.s32.totalorder %s9, 0
    %p71 = por %p69, %p70
    %p72 = scmp.ne.s32.totalorder %s64, %s66
    %p73 = scmp.eq.s32.totalorder %s14, 1
    %p74 = por %p72, %p73
    %p75 = scmp.ne.s32.totalorder %s66, %s67
    %p76 = scmp.eq.s32.totalorder %s14, 0
    %p77 = por %p75, %p76
    %p78 = scmp.ne.s32.totalorder %s66, %s67
    %p79 = scmp.eq.s32.totalorder %s15, 1
    %p80 = por %p78, %p79
    %p82 = scmp.ne.s32.totalorder %s67, %s81
    %p83 = scmp.eq.s32.totalorder %s15, 0
    %p84 = por %p82, %p83
    %s85 = ssub.s32 %s9, %s16
    %p86 = scmp.eq.s32.totalorder %s85, 0
    %s88 = sadd.s32 %s87, 1
    %s89 = scalar_select %p86, %s87, %s88
    %p92 = pneg %p86
    %p93 = scmp.eq.s32.totalorder %s9, 1
    %p94 = por %p92, %p93
    %p95 = scmp.ne.s32.totalorder %s87, %s90
    %p96 = scmp.eq.s32.totalorder %s9, 0
    %p97 = por %p95, %p96
    %p98 = scmp.ne.s32.totalorder %s87, %s90
    %p99 = scmp.eq.s32.totalorder %s14, 1
    %p100 = por %p98, %p99
    %p101 = scmp.ne.s32.totalorder %s90, %s91
    %p102 = scmp.eq.s32.totalorder %s14, 0
    %p103 = por %p101, %p102
    %p104 = scmp.ne.s32.totalorder %s90, %s91
    %p105 = scmp.eq.s32.totalorder %s15, 1
    %p106 = por %p104, %p105
    %p108 = scmp.ne.s32.totalorder %s91, %s107
    %p109 = scmp.eq.s32.totalorder %s15, 0
    %p110 = por %p108, %p109
    %p111 = scmp.le.s32.totalorder 1, %s9
    %p112 = scmp.lt.s32.totalorder %s9, 3
    %p113 = pnand %p111, %p112
    %p114 = pneg %p113
    // Predicated region
    $region9: #{partial_model_forward.1} parent=5 // pred_check
      _
    $region10: #{partial_model_forward.1} parent=5 // pred_check_branch
      %116 = sbr.rel (%p113) target = $region12
    $region11: #{partial_model_forward.1} parent=5 // pred_region
      %s117 = ssub.s32 %s9, 1
      // Predicated region
      $region13: #{partial_model_forward.1} parent=11 // pred_check
        %p118 = pneg %p56
      $region14: #{partial_model_forward.1} parent=11 // pred_check_branch
        %120 = sbr.rel (%p118) target = $region16
      $region15: #{partial_model_forward.1} parent=11 // pred_region
        _
      $region16: #{partial_model_forward.1} parent=11 // pred_fallthru
        _
      // Predicated region
      $region17: #{partial_model_forward.1} parent=11 // pred_check
        %p121 = pneg %p77
      $region18: #{partial_model_forward.1} parent=11 // pred_check_branch
        %123 = sbr.rel (%p121) target = $region20
      $region19: #{partial_model_forward.1} parent=11 // pred_region
        _
      $region20: #{partial_model_forward.1} parent=11 // pred_fallthru
        _
    $region12: #{partial_model_forward.1} parent=5 // pred_fallthru
      _
    %p124 = scmp.lt.s32.totalorder %s9, 2
    // Predicated region
    $region21: #{partial_model_forward.1} parent=5 // pred_check
      %p125 = pneg %p124
    $region22: #{partial_model_forward.1} parent=5 // pred_check_branch
      %127 = sbr.rel (%p125) target = $region24
    $region23: #{partial_model_forward.1} parent=5 // pred_region
      // Predicated region
      $region25: #{partial_model_forward.1} parent=23 // pred_check
        %p128 = pneg %p29
      $region26: #{partial_model_forward.1} parent=23 // pred_check_branch
        %130 = sbr.rel (%p128) target = $region28
      $region27: #{partial_model_forward.1} parent=23 // pred_region
        %s131 = smul.u32 8, %s9
        %p132 = scmp.lt.s32.totalorder %s131, 15
        %s133 = scalar_select %p132, %s131, 15
        %s134 = smul.addr %s133, 8
        %s135 = scalar_lea.vmem %s0, %s134
        %s136 = smul.u32 8, %s9
      $region28: #{partial_model_forward.1} parent=23 // pred_fallthru
        _
    $region24: #{partial_model_forward.1} parent=5 // pred_fallthru
      _
    %p137 = scmp.le.s32.totalorder 1, %s9
    %p138 = scmp.lt.s32.totalorder %s9, 3
    %p139 = pnand %p137, %p138
    %p140 = pneg %p139
    // Predicated region
    $region29: #{partial_model_forward.1} parent=5 // pred_check
      _
    $region30: #{partial_model_forward.1} parent=5 // pred_check_branch
      %142 = sbr.rel (%p139) target = $region32
    $region31: #{partial_model_forward.1} parent=5 // pred_region
      %s143 = ssub.s32 %s9, 1
      %s144 = smul.u32 8, %s14
      %p145 = scmp.lt.s32.totalorder %s144, 15
      %s146 = scalar_select %p145, %s144, 15
      %s147 = smul.addr %s146, 8
      %s148 = scalar_lea.vmem %s0, %s147
      %p149 = pneg %p35
      %p150 = pneg %p32
      %p151 = pneg %p56
      %p152 = pneg %p53
      %p153 = pneg %p77
      %p154 = pneg %p74
      %p155 = pneg %p103
      %p156 = pneg %p100
      %p157 = scmp.lt.s32.totalorder %s14, 1
      %s158 = scalar_select %p157, %s14, 1
      %s159 = smul.addr %s158, 8
      %s160 = scalar_lea.vmem %s3, %s159
      %s161 = smul.u32 8, %s14
      %p162 = scmp.lt.s32.totalorder %s161, 15
      %s163 = scalar_select %p162, %s161, 15
      %s164 = smul.addr %s163, 8
      %s165 = scalar_lea.vmem %s0, %s164
      %s166 = smul.u32 8, %s14
      %p167 = scmp.lt.s32.totalorder %s14, 1
      %s168 = scalar_select %p167, %s14, 1
      %s169 = smul.addr %s168, 8
      %s170 = scalar_lea.vmem %s3, %s169
      %v171 = vld [vmem:[%s165] sm:$0xff]
      %v172 = vld [vmem:[%s165 + $0x8] sm:$0xff]
      %v173 = vld [vmem:[%s165 + $0x10] sm:$0xff]
      %v174 = vld [vmem:[%s165 + $0x18] sm:$0xff]
      %v175 = vld [vmem:[%s165 + $0x20] sm:$0xff]
      %v176 = vld [vmem:[%s165 + $0x28] sm:$0xff]
      %v177 = vld [vmem:[%s165 + $0x30] sm:$0xff]
      %v178 = vld [vmem:[%s165 + $0x38] sm:$0xff]
      %v179 = vld [vmem:[%s1] sm:$0xff]
      %v180 = vld [vmem:[%s1 + $0x8] sm:$0xff]
      %v181 = vld [vmem:[%s1 + $0x10] sm:$0xff]
      %v182 = vld [vmem:[%s1 + $0x18] sm:$0xff]
      %v183 = vld [vmem:[%s1 + $0x20] sm:$0xff]
      %v184 = vld [vmem:[%s1 + $0x28] sm:$0xff]
      %v185 = vld [vmem:[%s1 + $0x30] sm:$0xff]
      %v186 = vld [vmem:[%s1 + $0x38] sm:$0xff]
      %v187 = vld [vmem:[%s1 + $0x40] sm:$0xff]
      %v188 = vld [vmem:[%s1 + $0x48] sm:$0xff]
      %v189 = vld [vmem:[%s1 + $0x50] sm:$0xff]
      %v190 = vld [vmem:[%s1 + $0x58] sm:$0xff]
      %v191 = vld [vmem:[%s1 + $0x60] sm:$0xff]
      %v192 = vld [vmem:[%s1 + $0x68] sm:$0xff]
      %v193 = vld [vmem:[%s1 + $0x70] sm:$0xff]
      %v194 = vld [vmem:[%s1 + $0x78] sm:$0xff]
      %v195 = vld [vmem:[%s2] sm:$0x1]
      %v197 = vlaneseq
      %v198 = vshrl.u32 %v197, 7
      %v199 = vsub.s32 0, %v198
      %v200 = vrot.slane %v195, %v199
      %202 = vmatprep.subr.mxu0 0.0
      %203 = vmatpush1.msra.mxu0 %v194
      %204 = vmatprep.subr.mxu0 0.0
      %205 = vmatpush1.msra.mxu0 %v193
      %206 = vmatprep.subr.mxu0 0.0
      %207 = vmatpush1.msra.mxu0 %v192
      %208 = vmatprep.subr.mxu0 0.0
      %209 = vmatpush1.msra.mxu0 %v191
      %210 = vmatprep.subr.mxu0 0.0
      %211 = vmatpush1.msra.mxu0 %v190
      %212 = vmatprep.subr.mxu0 0.0
      %213 = vmatpush1.msra.mxu0 %v189
      %214 = vmatprep.subr.mxu0 0.0
      %215 = vmatpush1.msra.mxu0 %v188
      %216 = vmatprep.subr.mxu0 0.0
      %217 = vmatpush1.msra.mxu0 %v187
      %218 = vmatprep.subr.mxu0 0.0
      %219 = vmatpush1.msra.mxu0 %v186
      %220 = vmatprep.subr.mxu0 0.0
      %221 = vmatpush1.msra.mxu0 %v185
      %222 = vmatprep.subr.mxu0 0.0
      %223 = vmatpush1.msra.mxu0 %v184
      %224 = vmatprep.subr.mxu0 0.0
      %225 = vmatpush1.msra.mxu0 %v183
      %226 = vmatprep.subr.mxu0 0.0
      %227 = vmatpush1.msra.mxu0 %v182
      %228 = vmatprep.subr.mxu0 0.0
      %229 = vmatpush1.msra.mxu0 %v181
      %230 = vmatprep.subr.mxu0 0.0
      %231 = vmatpush1.msra.mxu0 %v180
      %232 = vmatprep.subr.mxu0 0.0
      %233 = vmatpush1.msra.mxu0 %v179
      %234 = vmatprep.subr.mxu0 0.0
      %235 = vmatpush2.msra.mxu0 0.0
      %236 = vmatprep.subr.mxu0 0.0
      %237 = vmatpush2.msra.mxu0 0.0
      %238 = vmatprep.subr.mxu0 0.0
      %239 = vmatpush2.msra.mxu0 0.0
      %240 = vmatprep.subr.mxu0 0.0
      %241 = vmatpush2.msra.mxu0 0.0
      %242 = vmatprep.subr.mxu0 0.0
      %243 = vmatpush2.msra.mxu0 0.0
      %244 = vmatprep.subr.mxu0 0.0
      %245 = vmatpush2.msra.mxu0 0.0
      %246 = vmatprep.subr.mxu0 0.0
      %247 = vmatpush2.msra.mxu0 0.0
      %248 = vmatprep.subr.mxu0 0.0
      %249 = vmatpush2.msra.mxu0 0.0
      %250 = vmatprep.subr.mxu0 0.0
      %251 = vmatpush2.msra.mxu0 0.0
      %252 = vmatprep.subr.mxu0 0.0
      %253 = vmatpush2.msra.mxu0 0.0
      %254 = vmatprep.subr.mxu0 0.0
      %255 = vmatpush2.msra.mxu0 0.0
      %256 = vmatprep.subr.mxu0 0.0
      %257 = vmatpush2.msra.mxu0 0.0
      %258 = vmatprep.subr.mxu0 0.0
      %259 = vmatpush2.msra.mxu0 0.0
      %260 = vmatprep.subr.mxu0 0.0
      %261 = vmatpush2.msra.mxu0 0.0
      %262 = vmatprep.subr.mxu0 0.0
      %263 = vmatpush2.msra.mxu0 0.0
      %264 = vmatprep.subr.mxu0 0.0
      %265 = vmatpush2.msra.mxu0 0.0
      %266 = vmatprep.mubr.f32.mxu0 0.0
      %267 = vmatmul.mubr.f32.gmra.mxu0 %v171
      %v268 = vpop.f32.mrf.mxu0
      %v269 = vadd.f32 %v200, %v268
      %v270 = vpop.f32.mrf.mxu0
      %271 = vmatprep.mubr.f32.mxu0 0.0
      %272 = vmatmul.mubr.f32.gmra.mxu0 %v172
      %v273 = vpop.f32.mrf.mxu0
      %v274 = vadd.f32 %v200, %v273
      %v275 = vpop.f32.mrf.mxu0
      %276 = vmatprep.mubr.f32.mxu0 0.0
      %277 = vmatmul.mubr.f32.gmra.mxu0 %v173
      %v278 = vpop.f32.mrf.mxu0
      %v279 = vadd.f32 %v200, %v278
      %v280 = vpop.f32.mrf.mxu0
      %281 = vmatprep.mubr.f32.mxu0 0.0
      %282 = vmatmul.mubr.f32.gmra.mxu0 %v174
      %v283 = vpop.f32.mrf.mxu0
      %v284 = vadd.f32 %v200, %v283
      %v285 = vpop.f32.mrf.mxu0
      %286 = vmatprep.mubr.f32.mxu0 0.0
      %287 = vmatmul.mubr.f32.gmra.mxu0 %v175
      %v288 = vpop.f32.mrf.mxu0
      %v289 = vadd.f32 %v200, %v288
      %v290 = vpop.f32.mrf.mxu0
      %291 = vmatprep.mubr.f32.mxu0 0.0
      %292 = vmatmul.mubr.f32.gmra.mxu0 %v176
      %v293 = vpop.f32.mrf.mxu0
      %v294 = vadd.f32 %v200, %v293
      %v295 = vpop.f32.mrf.mxu0
      %296 = vmatprep.mubr.f32.mxu0 0.0
      %297 = vmatmul.mubr.f32.gmra.mxu0 %v177
      %v298 = vpop.f32.mrf.mxu0
      %v299 = vadd.f32 %v200, %v298
      %v300 = vpop.f32.mrf.mxu0
      %301 = vmatprep.mubr.f32.mxu0 0.0
      %302 = vmatmul.mubr.f32.gmra.mxu0 %v178
      %v303 = vpop.f32.mrf.mxu0
      %v304 = vadd.f32 %v200, %v303
      %v305 = vpop.f32.mrf.mxu0
      %306 = vdwg.mxu0
      %v307 = vmax.f32 %v269, 0.0
      %v308 = vmax.f32 %v274, 0.0
      %v309 = vmax.f32 %v279, 0.0
      %v310 = vmax.f32 %v284, 0.0
      %v311 = vmax.f32 %v289, 0.0
      %v312 = vmax.f32 %v294, 0.0
      %v313 = vmax.f32 %v299, 0.0
      %v314 = vmax.f32 %v304, 0.0
      %s315 = scalar_lea.vmem %s1, 128
      %v316 = vld [vmem:[%s315] sm:$0xff]
      %v317 = vld [vmem:[%s315 + $0x8] sm:$0xff]
      %v318 = vld [vmem:[%s315 + $0x10] sm:$0xff]
      %v319 = vld [vmem:[%s315 + $0x18] sm:$0xff]
      %v320 = vld [vmem:[%s315 + $0x20] sm:$0xff]
      %v321 = vld [vmem:[%s315 + $0x28] sm:$0xff]
      %v322 = vld [vmem:[%s315 + $0x30] sm:$0xff]
      %v323 = vld [vmem:[%s315 + $0x38] sm:$0xff]
      %v324 = vld [vmem:[%s315 + $0x40] sm:$0xff]
      %v325 = vld [vmem:[%s315 + $0x48] sm:$0xff]
      %v326 = vld [vmem:[%s315 + $0x50] sm:$0xff]
      %v327 = vld [vmem:[%s315 + $0x58] sm:$0xff]
      %v328 = vld [vmem:[%s315 + $0x60] sm:$0xff]
      %v329 = vld [vmem:[%s315 + $0x68] sm:$0xff]
      %v330 = vld [vmem:[%s315 + $0x70] sm:$0xff]
      %v331 = vld [vmem:[%s315 + $0x78] sm:$0xff]
      %s332 = scalar_lea.vmem %s2, 1
      %v333 = vld [vmem:[%s332] sm:$0x1]
      %v335 = vlaneseq
      %v336 = vshrl.u32 %v335, 7
      %v337 = vsub.s32 0, %v336
      %v338 = vrot.slane %v333, %v337
      %340 = vmatprep.subr.mxu0 0.0
      %341 = vmatpush1.msra.mxu0 %v331
      %342 = vmatprep.subr.mxu0 0.0
      %343 = vmatpush1.msra.mxu0 %v330
      %344 = vmatprep.subr.mxu0 0.0
      %345 = vmatpush1.msra.mxu0 %v329
      %346 = vmatprep.subr.mxu0 0.0
      %347 = vmatpush1.msra.mxu0 %v328
      %348 = vmatprep.subr.mxu0 0.0
      %349 = vmatpush1.msra.mxu0 %v327
      %350 = vmatprep.subr.mxu0 0.0
      %351 = vmatpush1.msra.mxu0 %v326
      %352 = vmatprep.subr.mxu0 0.0
      %353 = vmatpush1.msra.mxu0 %v325
      %354 = vmatprep.subr.mxu0 0.0
      %355 = vmatpush1.msra.mxu0 %v324
      %356 = vmatprep.subr.mxu0 0.0
      %357 = vmatpush1.msra.mxu0 %v323
      %358 = vmatprep.subr.mxu0 0.0
      %359 = vmatpush1.msra.mxu0 %v322
      %360 = vmatprep.subr.mxu0 0.0
      %361 = vmatpush1.msra.mxu0 %v321
      %362 = vmatprep.subr.mxu0 0.0
      %363 = vmatpush1.msra.mxu0 %v320
      %364 = vmatprep.subr.mxu0 0.0
      %365 = vmatpush1.msra.mxu0 %v319
      %366 = vmatprep.subr.mxu0 0.0
      %367 = vmatpush1.msra.mxu0 %v318
      %368 = vmatprep.subr.mxu0 0.0
      %369 = vmatpush1.msra.mxu0 %v317
      %370 = vmatprep.subr.mxu0 0.0
      %371 = vmatpush1.msra.mxu0 %v316
      %372 = vmatprep.subr.mxu0 0.0
      %373 = vmatpush2.msra.mxu0 0.0
      %374 = vmatprep.subr.mxu0 0.0
      %375 = vmatpush2.msra.mxu0 0.0
      %376 = vmatprep.subr.mxu0 0.0
      %377 = vmatpush2.msra.mxu0 0.0
      %378 = vmatprep.subr.mxu0 0.0
      %379 = vmatpush2.msra.mxu0 0.0
      %380 = vmatprep.subr.mxu0 0.0
      %381 = vmatpush2.msra.mxu0 0.0
      %382 = vmatprep.subr.mxu0 0.0
      %383 = vmatpush2.msra.mxu0 0.0
      %384 = vmatprep.subr.mxu0 0.0
      %385 = vmatpush2.msra.mxu0 0.0
      %386 = vmatprep.subr.mxu0 0.0
      %387 = vmatpush2.msra.mxu0 0.0
      %388 = vmatprep.subr.mxu0 0.0
      %389 = vmatpush2.msra.mxu0 0.0
      %390 = vmatprep.subr.mxu0 0.0
      %391 = vmatpush2.msra.mxu0 0.0
      %392 = vmatprep.subr.mxu0 0.0
      %393 = vmatpush2.msra.mxu0 0.0
      %394 = vmatprep.subr.mxu0 0.0
      %395 = vmatpush2.msra.mxu0 0.0
      %396 = vmatprep.subr.mxu0 0.0
      %397 = vmatpush2.msra.mxu0 0.0
      %398 = vmatprep.subr.mxu0 0.0
      %399 = vmatpush2.msra.mxu0 0.0
      %400 = vmatprep.subr.mxu0 0.0
      %401 = vmatpush2.msra.mxu0 0.0
      %402 = vmatprep.subr.mxu0 0.0
      %403 = vmatpush2.msra.mxu0 0.0
      %404 = vmatprep.mubr.f32.mxu0 0.0
      %405 = vmatmul.mubr.f32.gmra.mxu0 %v307
      %v406 = vpop.f32.mrf.mxu0
      %v407 = vadd.f32 %v338, %v406
      %v408 = vpop.f32.mrf.mxu0
      %409 = vmatprep.mubr.f32.mxu0 0.0
      %410 = vmatmul.mubr.f32.gmra.mxu0 %v308
      %v411 = vpop.f32.mrf.mxu0
      %v412 = vadd.f32 %v338, %v411
      %v413 = vpop.f32.mrf.mxu0
      %414 = vmatprep.mubr.f32.mxu0 0.0
      %415 = vmatmul.mubr.f32.gmra.mxu0 %v309
      %v416 = vpop.f32.mrf.mxu0
      %v417 = vadd.f32 %v338, %v416
      %v418 = vpop.f32.mrf.mxu0
      %419 = vmatprep.mubr.f32.mxu0 0.0
      %420 = vmatmul.mubr.f32.gmra.mxu0 %v310
      %v421 = vpop.f32.mrf.mxu0
      %v422 = vadd.f32 %v338, %v421
      %v423 = vpop.f32.mrf.mxu0
      %424 = vmatprep.mubr.f32.mxu0 0.0
      %425 = vmatmul.mubr.f32.gmra.mxu0 %v311
      %v426 = vpop.f32.mrf.mxu0
      %v427 = vadd.f32 %v338, %v426
      %v428 = vpop.f32.mrf.mxu0
      %429 = vmatprep.mubr.f32.mxu0 0.0
      %430 = vmatmul.mubr.f32.gmra.mxu0 %v312
      %v431 = vpop.f32.mrf.mxu0
      %v432 = vadd.f32 %v338, %v431
      %v433 = vpop.f32.mrf.mxu0
      %434 = vmatprep.mubr.f32.mxu0 0.0
      %435 = vmatmul.mubr.f32.gmra.mxu0 %v313
      %v436 = vpop.f32.mrf.mxu0
      %v437 = vadd.f32 %v338, %v436
      %v438 = vpop.f32.mrf.mxu0
      %439 = vmatprep.mubr.f32.mxu0 0.0
      %440 = vmatmul.mubr.f32.gmra.mxu0 %v314
      %v441 = vpop.f32.mrf.mxu0
      %v442 = vadd.f32 %v338, %v441
      %v443 = vpop.f32.mrf.mxu0
      %444 = vdwg.mxu0
      %v445 = vmax.f32 %v407, 0.0
      %v446 = vmax.f32 %v412, 0.0
      %v447 = vmax.f32 %v417, 0.0
      %v448 = vmax.f32 %v422, 0.0
      %v449 = vmax.f32 %v427, 0.0
      %v450 = vmax.f32 %v432, 0.0
      %v451 = vmax.f32 %v437, 0.0
      %v452 = vmax.f32 %v442, 0.0
      %s453 = scalar_lea.vmem %s1, 256
      %v454 = vld [vmem:[%s453] sm:$0xff]
      %v455 = vld [vmem:[%s453 + $0x8] sm:$0xff]
      %v456 = vld [vmem:[%s453 + $0x10] sm:$0xff]
      %v457 = vld [vmem:[%s453 + $0x18] sm:$0xff]
      %v458 = vld [vmem:[%s453 + $0x20] sm:$0xff]
      %v459 = vld [vmem:[%s453 + $0x28] sm:$0xff]
      %v460 = vld [vmem:[%s453 + $0x30] sm:$0xff]
      %v461 = vld [vmem:[%s453 + $0x38] sm:$0xff]
      %v462 = vld [vmem:[%s453 + $0x40] sm:$0xff]
      %v463 = vld [vmem:[%s453 + $0x48] sm:$0xff]
      %v464 = vld [vmem:[%s453 + $0x50] sm:$0xff]
      %v465 = vld [vmem:[%s453 + $0x58] sm:$0xff]
      %v466 = vld [vmem:[%s453 + $0x60] sm:$0xff]
      %v467 = vld [vmem:[%s453 + $0x68] sm:$0xff]
      %v468 = vld [vmem:[%s453 + $0x70] sm:$0xff]
      %v469 = vld [vmem:[%s453 + $0x78] sm:$0xff]
      %s470 = scalar_lea.vmem %s2, 2
      %v471 = vld [vmem:[%s470] sm:$0x1]
      %v473 = vlaneseq
      %v474 = vshrl.u32 %v473, 7
      %v475 = vsub.s32 0, %v474
      %v476 = vrot.slane %v471, %v475
      %478 = vmatprep.subr.mxu0 0.0
      %479 = vmatpush1.msra.mxu0 %v469
      %480 = vmatprep.subr.mxu0 0.0
      %481 = vmatpush1.msra.mxu0 %v468
      %482 = vmatprep.subr.mxu0 0.0
      %483 = vmatpush1.msra.mxu0 %v467
      %484 = vmatprep.subr.mxu0 0.0
      %485 = vmatpush1.msra.mxu0 %v466
      %486 = vmatprep.subr.mxu0 0.0
      %487 = vmatpush1.msra.mxu0 %v465
      %488 = vmatprep.subr.mxu0 0.0
      %489 = vmatpush1.msra.mxu0 %v464
      %490 = vmatprep.subr.mxu0 0.0
      %491 = vmatpush1.msra.mxu0 %v463
      %492 = vmatprep.subr.mxu0 0.0
      %493 = vmatpush1.msra.mxu0 %v462
      %494 = vmatprep.subr.mxu0 0.0
      %495 = vmatpush1.msra.mxu0 %v461
      %496 = vmatprep.subr.mxu0 0.0
      %497 = vmatpush1.msra.mxu0 %v460
      %498 = vmatprep.subr.mxu0 0.0
      %499 = vmatpush1.msra.mxu0 %v459
      %500 = vmatprep.subr.mxu0 0.0
      %501 = vmatpush1.msra.mxu0 %v458
      %502 = vmatprep.subr.mxu0 0.0
      %503 = vmatpush1.msra.mxu0 %v457
      %504 = vmatprep.subr.mxu0 0.0
      %505 = vmatpush1.msra.mxu0 %v456
      %506 = vmatprep.subr.mxu0 0.0
      %507 = vmatpush1.msra.mxu0 %v455
      %508 = vmatprep.subr.mxu0 0.0
      %509 = vmatpush1.msra.mxu0 %v454
      %510 = vmatprep.subr.mxu0 0.0
      %511 = vmatpush2.msra.mxu0 0.0
      %512 = vmatprep.subr.mxu0 0.0
      %513 = vmatpush2.msra.mxu0 0.0
      %514 = vmatprep.subr.mxu0 0.0
      %515 = vmatpush2.msra.mxu0 0.0
      %516 = vmatprep.subr.mxu0 0.0
      %517 = vmatpush2.msra.mxu0 0.0
      %518 = vmatprep.subr.mxu0 0.0
      %519 = vmatpush2.msra.mxu0 0.0
      %520 = vmatprep.subr.mxu0 0.0
      %521 = vmatpush2.msra.mxu0 0.0
      %522 = vmatprep.subr.mxu0 0.0
      %523 = vmatpush2.msra.mxu0 0.0
      %524 = vmatprep.subr.mxu0 0.0
      %525 = vmatpush2.msra.mxu0 0.0
      %526 = vmatprep.subr.mxu0 0.0
      %527 = vmatpush2.msra.mxu0 0.0
      %528 = vmatprep.subr.mxu0 0.0
      %529 = vmatpush2.msra.mxu0 0.0
      %530 = vmatprep.subr.mxu0 0.0
      %531 = vmatpush2.msra.mxu0 0.0
      %532 = vmatprep.subr.mxu0 0.0
      %533 = vmatpush2.msra.mxu0 0.0
      %534 = vmatprep.subr.mxu0 0.0
      %535 = vmatpush2.msra.mxu0 0.0
      %536 = vmatprep.subr.mxu0 0.0
      %537 = vmatpush2.msra.mxu0 0.0
      %538 = vmatprep.subr.mxu0 0.0
      %539 = vmatpush2.msra.mxu0 0.0
      %540 = vmatprep.subr.mxu0 0.0
      %541 = vmatpush2.msra.mxu0 0.0
      %542 = vmatprep.mubr.f32.mxu0 0.0
      %543 = vmatmul.mubr.f32.gmra.mxu0 %v445
      %v544 = vpop.f32.mrf.mxu0
      %v545 = vadd.f32 %v476, %v544
      %v546 = vpop.f32.mrf.mxu0
      %547 = vmatprep.mubr.f32.mxu0 0.0
      %548 = vmatmul.mubr.f32.gmra.mxu0 %v446
      %v549 = vpop.f32.mrf.mxu0
      %v550 = vadd.f32 %v476, %v549
      %v551 = vpop.f32.mrf.mxu0
      %552 = vmatprep.mubr.f32.mxu0 0.0
      %553 = vmatmul.mubr.f32.gmra.mxu0 %v447
      %v554 = vpop.f32.mrf.mxu0
      %v555 = vadd.f32 %v476, %v554
      %v556 = vpop.f32.mrf.mxu0
      %557 = vmatprep.mubr.f32.mxu0 0.0
      %558 = vmatmul.mubr.f32.gmra.mxu0 %v448
      %v559 = vpop.f32.mrf.mxu0
      %v560 = vadd.f32 %v476, %v559
      %v561 = vpop.f32.mrf.mxu0
      %562 = vmatprep.mubr.f32.mxu0 0.0
      %563 = vmatmul.mubr.f32.gmra.mxu0 %v449
      %v564 = vpop.f32.mrf.mxu0
      %v565 = vadd.f32 %v476, %v564
      %v566 = vpop.f32.mrf.mxu0
      %567 = vmatprep.mubr.f32.mxu0 0.0
      %568 = vmatmul.mubr.f32.gmra.mxu0 %v450
      %v569 = vpop.f32.mrf.mxu0
      %v570 = vadd.f32 %v476, %v569
      %v571 = vpop.f32.mrf.mxu0
      %572 = vmatprep.mubr.f32.mxu0 0.0
      %573 = vmatmul.mubr.f32.gmra.mxu0 %v451
      %v574 = vpop.f32.mrf.mxu0
      %v575 = vadd.f32 %v476, %v574
      %v576 = vpop.f32.mrf.mxu0
      %577 = vmatprep.mubr.f32.mxu0 0.0
      %578 = vmatmul.mubr.f32.gmra.mxu0 %v452
      %v579 = vpop.f32.mrf.mxu0
      %v580 = vadd.f32 %v476, %v579
      %v581 = vpop.f32.mrf.mxu0
      %582 = vdwg.mxu0
      %v583 = vmax.f32 %v545, 0.0
      %v584 = vmax.f32 %v550, 0.0
      %v585 = vmax.f32 %v555, 0.0
      %v586 = vmax.f32 %v560, 0.0
      %v587 = vmax.f32 %v565, 0.0
      %v588 = vmax.f32 %v570, 0.0
      %v589 = vmax.f32 %v575, 0.0
      %v590 = vmax.f32 %v580, 0.0
      %s591 = scalar_lea.vmem %s1, 384
      %v592 = vld [vmem:[%s591] sm:$0xff]
      %v593 = vld [vmem:[%s591 + $0x8] sm:$0xff]
      %v594 = vld [vmem:[%s591 + $0x10] sm:$0xff]
      %v595 = vld [vmem:[%s591 + $0x18] sm:$0xff]
      %v596 = vld [vmem:[%s591 + $0x20] sm:$0xff]
      %v597 = vld [vmem:[%s591 + $0x28] sm:$0xff]
      %v598 = vld [vmem:[%s591 + $0x30] sm:$0xff]
      %v599 = vld [vmem:[%s591 + $0x38] sm:$0xff]
      %v600 = vld [vmem:[%s591 + $0x40] sm:$0xff]
      %v601 = vld [vmem:[%s591 + $0x48] sm:$0xff]
      %v602 = vld [vmem:[%s591 + $0x50] sm:$0xff]
      %v603 = vld [vmem:[%s591 + $0x58] sm:$0xff]
      %v604 = vld [vmem:[%s591 + $0x60] sm:$0xff]
      %v605 = vld [vmem:[%s591 + $0x68] sm:$0xff]
      %v606 = vld [vmem:[%s591 + $0x70] sm:$0xff]
      %v607 = vld [vmem:[%s591 + $0x78] sm:$0xff]
      %s608 = scalar_lea.vmem %s2, 3
      %v609 = vld [vmem:[%s608] sm:$0x1]
      %v611 = vlaneseq
      %v612 = vshrl.u32 %v611, 7
      %v613 = vsub.s32 0, %v612
      %v614 = vrot.slane %v609, %v613
      %616 = vmatprep.subr.mxu0 0.0
      %617 = vmatpush1.msra.mxu0 %v607
      %618 = vmatprep.subr.mxu0 0.0
      %619 = vmatpush1.msra.mxu0 %v606
      %620 = vmatprep.subr.mxu0 0.0
      %621 = vmatpush1.msra.mxu0 %v605
      %622 = vmatprep.subr.mxu0 0.0
      %623 = vmatpush1.msra.mxu0 %v604
      %624 = vmatprep.subr.mxu0 0.0
      %625 = vmatpush1.msra.mxu0 %v603
      %626 = vmatprep.subr.mxu0 0.0
      %627 = vmatpush1.msra.mxu0 %v602
      %628 = vmatprep.subr.mxu0 0.0
      %629 = vmatpush1.msra.mxu0 %v601
      %630 = vmatprep.subr.mxu0 0.0
      %631 = vmatpush1.msra.mxu0 %v600
      %632 = vmatprep.subr.mxu0 0.0
      %633 = vmatpush1.msra.mxu0 %v599
      %634 = vmatprep.subr.mxu0 0.0
      %635 = vmatpush1.msra.mxu0 %v598
      %636 = vmatprep.subr.mxu0 0.0
      %637 = vmatpush1.msra.mxu0 %v597
      %638 = vmatprep.subr.mxu0 0.0
      %639 = vmatpush1.msra.mxu0 %v596
      %640 = vmatprep.subr.mxu0 0.0
      %641 = vmatpush1.msra.mxu0 %v595
      %642 = vmatprep.subr.mxu0 0.0
      %643 = vmatpush1.msra.mxu0 %v594
      %644 = vmatprep.subr.mxu0 0.0
      %645 = vmatpush1.msra.mxu0 %v593
      %646 = vmatprep.subr.mxu0 0.0
      %647 = vmatpush1.msra.mxu0 %v592
      %648 = vmatprep.subr.mxu0 0.0
      %649 = vmatpush2.msra.mxu0 0.0
      %650 = vmatprep.subr.mxu0 0.0
      %651 = vmatpush2.msra.mxu0 0.0
      %652 = vmatprep.subr.mxu0 0.0
      %653 = vmatpush2.msra.mxu0 0.0
      %654 = vmatprep.subr.mxu0 0.0
      %655 = vmatpush2.msra.mxu0 0.0
      %656 = vmatprep.subr.mxu0 0.0
      %657 = vmatpush2.msra.mxu0 0.0
      %658 = vmatprep.subr.mxu0 0.0
      %659 = vmatpush2.msra.mxu0 0.0
      %660 = vmatprep.subr.mxu0 0.0
      %661 = vmatpush2.msra.mxu0 0.0
      %662 = vmatprep.subr.mxu0 0.0
      %663 = vmatpush2.msra.mxu0 0.0
      %664 = vmatprep.subr.mxu0 0.0
      %665 = vmatpush2.msra.mxu0 0.0
      %666 = vmatprep.subr.mxu0 0.0
      %667 = vmatpush2.msra.mxu0 0.0
      %668 = vmatprep.subr.mxu0 0.0
      %669 = vmatpush2.msra.mxu0 0.0
      %670 = vmatprep.subr.mxu0 0.0
      %671 = vmatpush2.msra.mxu0 0.0
      %672 = vmatprep.subr.mxu0 0.0
      %673 = vmatpush2.msra.mxu0 0.0
      %674 = vmatprep.subr.mxu0 0.0
      %675 = vmatpush2.msra.mxu0 0.0
      %676 = vmatprep.subr.mxu0 0.0
      %677 = vmatpush2.msra.mxu0 0.0
      %678 = vmatprep.subr.mxu0 0.0
      %679 = vmatpush2.msra.mxu0 0.0
      %680 = vmatprep.mubr.f32.mxu0 0.0
      %681 = vmatmul.mubr.f32.gmra.mxu0 %v583
      %v682 = vpop.f32.mrf.mxu0
      %v683 = vadd.f32 %v614, %v682
      %v684 = vpop.f32.mrf.mxu0
      %685 = vmatprep.mubr.f32.mxu0 0.0
      %686 = vmatmul.mubr.f32.gmra.mxu0 %v584
      %v687 = vpop.f32.mrf.mxu0
      %v688 = vadd.f32 %v614, %v687
      %v689 = vpop.f32.mrf.mxu0
      %690 = vmatprep.mubr.f32.mxu0 0.0
      %691 = vmatmul.mubr.f32.gmra.mxu0 %v585
      %v692 = vpop.f32.mrf.mxu0
      %v693 = vadd.f32 %v614, %v692
      %v694 = vpop.f32.mrf.mxu0
      %695 = vmatprep.mubr.f32.mxu0 0.0
      %696 = vmatmul.mubr.f32.gmra.mxu0 %v586
      %v697 = vpop.f32.mrf.mxu0
      %v698 = vadd.f32 %v614, %v697
      %v699 = vpop.f32.mrf.mxu0
      %700 = vmatprep.mubr.f32.mxu0 0.0
      %701 = vmatmul.mubr.f32.gmra.mxu0 %v587
      %v702 = vpop.f32.mrf.mxu0
      %v703 = vadd.f32 %v614, %v702
      %v704 = vpop.f32.mrf.mxu0
      %705 = vmatprep.mubr.f32.mxu0 0.0
      %706 = vmatmul.mubr.f32.gmra.mxu0 %v588
      %v707 = vpop.f32.mrf.mxu0
      %v708 = vadd.f32 %v614, %v707
      %v709 = vpop.f32.mrf.mxu0
      %710 = vmatprep.mubr.f32.mxu0 0.0
      %711 = vmatmul.mubr.f32.gmra.mxu0 %v589
      %v712 = vpop.f32.mrf.mxu0
      %v713 = vadd.f32 %v614, %v712
      %v714 = vpop.f32.mrf.mxu0
      %715 = vmatprep.mubr.f32.mxu0 0.0
      %716 = vmatmul.mubr.f32.gmra.mxu0 %v590
      %v717 = vpop.f32.mrf.mxu0
      %v718 = vadd.f32 %v614, %v717
      %v719 = vpop.f32.mrf.mxu0
      %720 = vdwg.mxu0
      %v721 = vmax.f32 %v683, 0.0
      %v722 = vmax.f32 %v688, 0.0
      %v723 = vmax.f32 %v693, 0.0
      %v724 = vmax.f32 %v698, 0.0
      %v725 = vmax.f32 %v703, 0.0
      %v726 = vmax.f32 %v708, 0.0
      %v727 = vmax.f32 %v713, 0.0
      %v728 = vmax.f32 %v718, 0.0
      %s729 = scalar_lea.vmem %s1, 512
      %v730 = vld [vmem:[%s729] sm:$0xff]
      %v731 = vld [vmem:[%s729 + $0x8] sm:$0xff]
      %v732 = vld [vmem:[%s729 + $0x10] sm:$0xff]
      %v733 = vld [vmem:[%s729 + $0x18] sm:$0xff]
      %v734 = vld [vmem:[%s729 + $0x20] sm:$0xff]
      %v735 = vld [vmem:[%s729 + $0x28] sm:$0xff]
      %v736 = vld [vmem:[%s729 + $0x30] sm:$0xff]
      %v737 = vld [vmem:[%s729 + $0x38] sm:$0xff]
      %v738 = vld [vmem:[%s729 + $0x40] sm:$0xff]
      %v739 = vld [vmem:[%s729 + $0x48] sm:$0xff]
      %v740 = vld [vmem:[%s729 + $0x50] sm:$0xff]
      %v741 = vld [vmem:[%s729 + $0x58] sm:$0xff]
      %v742 = vld [vmem:[%s729 + $0x60] sm:$0xff]
      %v743 = vld [vmem:[%s729 + $0x68] sm:$0xff]
      %v744 = vld [vmem:[%s729 + $0x70] sm:$0xff]
      %v745 = vld [vmem:[%s729 + $0x78] sm:$0xff]
      %s746 = scalar_lea.vmem %s2, 4
      %v747 = vld [vmem:[%s746] sm:$0x1]
      %v749 = vlaneseq
      %v750 = vshrl.u32 %v749, 7
      %v751 = vsub.s32 0, %v750
      %v752 = vrot.slane %v747, %v751
      %754 = vmatprep.subr.mxu0 0.0
      %755 = vmatpush1.msra.mxu0 %v745
      %756 = vmatprep.subr.mxu0 0.0
      %757 = vmatpush1.msra.mxu0 %v744
      %758 = vmatprep.subr.mxu0 0.0
      %759 = vmatpush1.msra.mxu0 %v743
      %760 = vmatprep.subr.mxu0 0.0
      %761 = vmatpush1.msra.mxu0 %v742
      %762 = vmatprep.subr.mxu0 0.0
      %763 = vmatpush1.msra.mxu0 %v741
      %764 = vmatprep.subr.mxu0 0.0
      %765 = vmatpush1.msra.mxu0 %v740
      %766 = vmatprep.subr.mxu0 0.0
      %767 = vmatpush1.msra.mxu0 %v739
      %768 = vmatprep.subr.mxu0 0.0
      %769 = vmatpush1.msra.mxu0 %v738
      %770 = vmatprep.subr.mxu0 0.0
      %771 = vmatpush1.msra.mxu0 %v737
      %772 = vmatprep.subr.mxu0 0.0
      %773 = vmatpush1.msra.mxu0 %v736
      %774 = vmatprep.subr.mxu0 0.0
      %775 = vmatpush1.msra.mxu0 %v735
      %776 = vmatprep.subr.mxu0 0.0
      %777 = vmatpush1.msra.mxu0 %v734
      %778 = vmatprep.subr.mxu0 0.0
      %779 = vmatpush1.msra.mxu0 %v733
      %780 = vmatprep.subr.mxu0 0.0
      %781 = vmatpush1.msra.mxu0 %v732
      %782 = vmatprep.subr.mxu0 0.0
      %783 = vmatpush1.msra.mxu0 %v731
      %784 = vmatprep.subr.mxu0 0.0
      %785 = vmatpush1.msra.mxu0 %v730
      %786 = vmatprep.subr.mxu0 0.0
      %787 = vmatpush2.msra.mxu0 0.0
      %788 = vmatprep.subr.mxu0 0.0
      %789 = vmatpush2.msra.mxu0 0.0
      %790 = vmatprep.subr.mxu0 0.0
      %791 = vmatpush2.msra.mxu0 0.0
      %792 = vmatprep.subr.mxu0 0.0
      %793 = vmatpush2.msra.mxu0 0.0
      %794 = vmatprep.subr.mxu0 0.0
      %795 = vmatpush2.msra.mxu0 0.0
      %796 = vmatprep.subr.mxu0 0.0
      %797 = vmatpush2.msra.mxu0 0.0
      %798 = vmatprep.subr.mxu0 0.0
      %799 = vmatpush2.msra.mxu0 0.0
      %800 = vmatprep.subr.mxu0 0.0
      %801 = vmatpush2.msra.mxu0 0.0
      %802 = vmatprep.subr.mxu0 0.0
      %803 = vmatpush2.msra.mxu0 0.0
      %804 = vmatprep.subr.mxu0 0.0
      %805 = vmatpush2.msra.mxu0 0.0
      %806 = vmatprep.subr.mxu0 0.0
      %807 = vmatpush2.msra.mxu0 0.0
      %808 = vmatprep.subr.mxu0 0.0
      %809 = vmatpush2.msra.mxu0 0.0
      %810 = vmatprep.subr.mxu0 0.0
      %811 = vmatpush2.msra.mxu0 0.0
      %812 = vmatprep.subr.mxu0 0.0
      %813 = vmatpush2.msra.mxu0 0.0
      %814 = vmatprep.subr.mxu0 0.0
      %815 = vmatpush2.msra.mxu0 0.0
      %816 = vmatprep.subr.mxu0 0.0
      %817 = vmatpush2.msra.mxu0 0.0
      %818 = vmatprep.mubr.f32.mxu0 0.0
      %819 = vmatmul.mubr.f32.gmra.mxu0 %v721
      %v820 = vpop.f32.mrf.mxu0
      %v821 = vadd.f32 %v752, %v820
      %v822 = vpop.f32.mrf.mxu0
      %823 = vmatprep.mubr.f32.mxu0 0.0
      %824 = vmatmul.mubr.f32.gmra.mxu0 %v722
      %v825 = vpop.f32.mrf.mxu0
      %v826 = vadd.f32 %v752, %v825
      %v827 = vpop.f32.mrf.mxu0
      %828 = vmatprep.mubr.f32.mxu0 0.0
      %829 = vmatmul.mubr.f32.gmra.mxu0 %v723
      %v830 = vpop.f32.mrf.mxu0
      %v831 = vadd.f32 %v752, %v830
      %v832 = vpop.f32.mrf.mxu0
      %833 = vmatprep.mubr.f32.mxu0 0.0
      %834 = vmatmul.mubr.f32.gmra.mxu0 %v724
      %v835 = vpop.f32.mrf.mxu0
      %v836 = vadd.f32 %v752, %v835
      %v837 = vpop.f32.mrf.mxu0
      %838 = vmatprep.mubr.f32.mxu0 0.0
      %839 = vmatmul.mubr.f32.gmra.mxu0 %v725
      %v840 = vpop.f32.mrf.mxu0
      %v841 = vadd.f32 %v752, %v840
      %v842 = vpop.f32.mrf.mxu0
      %843 = vmatprep.mubr.f32.mxu0 0.0
      %844 = vmatmul.mubr.f32.gmra.mxu0 %v726
      %v845 = vpop.f32.mrf.mxu0
      %v846 = vadd.f32 %v752, %v845
      %v847 = vpop.f32.mrf.mxu0
      %848 = vmatprep.mubr.f32.mxu0 0.0
      %849 = vmatmul.mubr.f32.gmra.mxu0 %v727
      %v850 = vpop.f32.mrf.mxu0
      %v851 = vadd.f32 %v752, %v850
      %v852 = vpop.f32.mrf.mxu0
      %853 = vmatprep.mubr.f32.mxu0 0.0
      %854 = vmatmul.mubr.f32.gmra.mxu0 %v728
      %v855 = vpop.f32.mrf.mxu0
      %v856 = vadd.f32 %v752, %v855
      %v857 = vpop.f32.mrf.mxu0
      %858 = vdwg.mxu0
      %v859 = vmax.f32 %v821, 0.0
      %v860 = vmax.f32 %v826, 0.0
      %v861 = vmax.f32 %v831, 0.0
      %v862 = vmax.f32 %v836, 0.0
      %v863 = vmax.f32 %v841, 0.0
      %v864 = vmax.f32 %v846, 0.0
      %v865 = vmax.f32 %v851, 0.0
      %v866 = vmax.f32 %v856, 0.0
      %s867 = scalar_lea.vmem %s1, 640
      %v868 = vld [vmem:[%s867] sm:$0xff]
      %v869 = vld [vmem:[%s867 + $0x8] sm:$0xff]
      %v870 = vld [vmem:[%s867 + $0x10] sm:$0xff]
      %v871 = vld [vmem:[%s867 + $0x18] sm:$0xff]
      %v872 = vld [vmem:[%s867 + $0x20] sm:$0xff]
      %v873 = vld [vmem:[%s867 + $0x28] sm:$0xff]
      %v874 = vld [vmem:[%s867 + $0x30] sm:$0xff]
      %v875 = vld [vmem:[%s867 + $0x38] sm:$0xff]
      %v876 = vld [vmem:[%s867 + $0x40] sm:$0xff]
      %v877 = vld [vmem:[%s867 + $0x48] sm:$0xff]
      %v878 = vld [vmem:[%s867 + $0x50] sm:$0xff]
      %v879 = vld [vmem:[%s867 + $0x58] sm:$0xff]
      %v880 = vld [vmem:[%s867 + $0x60] sm:$0xff]
      %v881 = vld [vmem:[%s867 + $0x68] sm:$0xff]
      %v882 = vld [vmem:[%s867 + $0x70] sm:$0xff]
      %v883 = vld [vmem:[%s867 + $0x78] sm:$0xff]
      %s884 = scalar_lea.vmem %s2, 5
      %v885 = vld [vmem:[%s884] sm:$0x1]
      %v887 = vlaneseq
      %v888 = vshrl.u32 %v887, 7
      %v889 = vsub.s32 0, %v888
      %v890 = vrot.slane %v885, %v889
      %892 = vmatprep.subr.mxu0 0.0
      %893 = vmatpush1.msra.mxu0 %v883
      %894 = vmatprep.subr.mxu0 0.0
      %895 = vmatpush1.msra.mxu0 %v882
      %896 = vmatprep.subr.mxu0 0.0
      %897 = vmatpush1.msra.mxu0 %v881
      %898 = vmatprep.subr.mxu0 0.0
      %899 = vmatpush1.msra.mxu0 %v880
      %900 = vmatprep.subr.mxu0 0.0
      %901 = vmatpush1.msra.mxu0 %v879
      %902 = vmatprep.subr.mxu0 0.0
      %903 = vmatpush1.msra.mxu0 %v878
      %904 = vmatprep.subr.mxu0 0.0
      %905 = vmatpush1.msra.mxu0 %v877
      %906 = vmatprep.subr.mxu0 0.0
      %907 = vmatpush1.msra.mxu0 %v876
      %908 = vmatprep.subr.mxu0 0.0
      %909 = vmatpush1.msra.mxu0 %v875
      %910 = vmatprep.subr.mxu0 0.0
      %911 = vmatpush1.msra.mxu0 %v874
      %912 = vmatprep.subr.mxu0 0.0
      %913 = vmatpush1.msra.mxu0 %v873
      %914 = vmatprep.subr.mxu0 0.0
      %915 = vmatpush1.msra.mxu0 %v872
      %916 = vmatprep.subr.mxu0 0.0
      %917 = vmatpush1.msra.mxu0 %v871
      %918 = vmatprep.subr.mxu0 0.0
      %919 = vmatpush1.msra.mxu0 %v870
      %920 = vmatprep.subr.mxu0 0.0
      %921 = vmatpush1.msra.mxu0 %v869
      %922 = vmatprep.subr.mxu0 0.0
      %923 = vmatpush1.msra.mxu0 %v868
      %924 = vmatprep.subr.mxu0 0.0
      %925 = vmatpush2.msra.mxu0 0.0
      %926 = vmatprep.subr.mxu0 0.0
      %927 = vmatpush2.msra.mxu0 0.0
      %928 = vmatprep.subr.mxu0 0.0
      %929 = vmatpush2.msra.mxu0 0.0
      %930 = vmatprep.subr.mxu0 0.0
      %931 = vmatpush2.msra.mxu0 0.0
      %932 = vmatprep.subr.mxu0 0.0
      %933 = vmatpush2.msra.mxu0 0.0
      %934 = vmatprep.subr.mxu0 0.0
      %935 = vmatpush2.msra.mxu0 0.0
      %936 = vmatprep.subr.mxu0 0.0
      %937 = vmatpush2.msra.mxu0 0.0
      %938 = vmatprep.subr.mxu0 0.0
      %939 = vmatpush2.msra.mxu0 0.0
      %940 = vmatprep.subr.mxu0 0.0
      %941 = vmatpush2.msra.mxu0 0.0
      %942 = vmatprep.subr.mxu0 0.0
      %943 = vmatpush2.msra.mxu0 0.0
      %944 = vmatprep.subr.mxu0 0.0
      %945 = vmatpush2.msra.mxu0 0.0
      %946 = vmatprep.subr.mxu0 0.0
      %947 = vmatpush2.msra.mxu0 0.0
      %948 = vmatprep.subr.mxu0 0.0
      %949 = vmatpush2.msra.mxu0 0.0
      %950 = vmatprep.subr.mxu0 0.0
      %951 = vmatpush2.msra.mxu0 0.0
      %952 = vmatprep.subr.mxu0 0.0
      %953 = vmatpush2.msra.mxu0 0.0
      %954 = vmatprep.subr.mxu0 0.0
      %955 = vmatpush2.msra.mxu0 0.0
      %956 = vmatprep.mubr.f32.mxu0 0.0
      %957 = vmatmul.mubr.f32.gmra.mxu0 %v859
      %v958 = vpop.f32.mrf.mxu0
      %v959 = vadd.f32 %v890, %v958
      %v960 = vpop.f32.mrf.mxu0
      %961 = vmatprep.mubr.f32.mxu0 0.0
      %962 = vmatmul.mubr.f32.gmra.mxu0 %v860
      %v963 = vpop.f32.mrf.mxu0
      %v964 = vadd.f32 %v890, %v963
      %v965 = vpop.f32.mrf.mxu0
      %966 = vmatprep.mubr.f32.mxu0 0.0
      %967 = vmatmul.mubr.f32.gmra.mxu0 %v861
      %v968 = vpop.f32.mrf.mxu0
      %v969 = vadd.f32 %v890, %v968
      %v970 = vpop.f32.mrf.mxu0
      %971 = vmatprep.mubr.f32.mxu0 0.0
      %972 = vmatmul.mubr.f32.gmra.mxu0 %v862
      %v973 = vpop.f32.mrf.mxu0
      %v974 = vadd.f32 %v890, %v973
      %v975 = vpop.f32.mrf.mxu0
      %976 = vmatprep.mubr.f32.mxu0 0.0
      %977 = vmatmul.mubr.f32.gmra.mxu0 %v863
      %v978 = vpop.f32.mrf.mxu0
      %v979 = vadd.f32 %v890, %v978
      %v980 = vpop.f32.mrf.mxu0
      %981 = vmatprep.mubr.f32.mxu0 0.0
      %982 = vmatmul.mubr.f32.gmra.mxu0 %v864
      %v983 = vpop.f32.mrf.mxu0
      %v984 = vadd.f32 %v890, %v983
      %v985 = vpop.f32.mrf.mxu0
      %986 = vmatprep.mubr.f32.mxu0 0.0
      %987 = vmatmul.mubr.f32.gmra.mxu0 %v865
      %v988 = vpop.f32.mrf.mxu0
      %v989 = vadd.f32 %v890, %v988
      %v990 = vpop.f32.mrf.mxu0
      %991 = vmatprep.mubr.f32.mxu0 0.0
      %992 = vmatmul.mubr.f32.gmra.mxu0 %v866
      %v993 = vpop.f32.mrf.mxu0
      %v994 = vadd.f32 %v890, %v993
      %v995 = vpop.f32.mrf.mxu0
      %996 = vdwg.mxu0
      %v997 = vmax.f32 %v959, 0.0
      %v998 = vmax.f32 %v964, 0.0
      %v999 = vmax.f32 %v969, 0.0
      %v1000 = vmax.f32 %v974, 0.0
      %v1001 = vmax.f32 %v979, 0.0
      %v1002 = vmax.f32 %v984, 0.0
      %v1003 = vmax.f32 %v989, 0.0
      %v1004 = vmax.f32 %v994, 0.0
      %s1005 = scalar_lea.vmem %s1, 768
      %v1006 = vld [vmem:[%s1005] sm:$0xff]
      %v1007 = vld [vmem:[%s1005 + $0x8] sm:$0xff]
      %v1008 = vld [vmem:[%s1005 + $0x10] sm:$0xff]
      %v1009 = vld [vmem:[%s1005 + $0x18] sm:$0xff]
      %v1010 = vld [vmem:[%s1005 + $0x20] sm:$0xff]
      %v1011 = vld [vmem:[%s1005 + $0x28] sm:$0xff]
      %v1012 = vld [vmem:[%s1005 + $0x30] sm:$0xff]
      %v1013 = vld [vmem:[%s1005 + $0x38] sm:$0xff]
      %v1014 = vld [vmem:[%s1005 + $0x40] sm:$0xff]
      %v1015 = vld [vmem:[%s1005 + $0x48] sm:$0xff]
      %v1016 = vld [vmem:[%s1005 + $0x50] sm:$0xff]
      %v1017 = vld [vmem:[%s1005 + $0x58] sm:$0xff]
      %v1018 = vld [vmem:[%s1005 + $0x60] sm:$0xff]
      %v1019 = vld [vmem:[%s1005 + $0x68] sm:$0xff]
      %v1020 = vld [vmem:[%s1005 + $0x70] sm:$0xff]
      %v1021 = vld [vmem:[%s1005 + $0x78] sm:$0xff]
      %s1022 = scalar_lea.vmem %s2, 6
      %v1023 = vld [vmem:[%s1022] sm:$0x1]
      %v1025 = vlaneseq
      %v1026 = vshrl.u32 %v1025, 7
      %v1027 = vsub.s32 0, %v1026
      %v1028 = vrot.slane %v1023, %v1027
      %1030 = vmatprep.subr.mxu0 0.0
      %1031 = vmatpush1.msra.mxu0 %v1021
      %1032 = vmatprep.subr.mxu0 0.0
      %1033 = vmatpush1.msra.mxu0 %v1020
      %1034 = vmatprep.subr.mxu0 0.0
      %1035 = vmatpush1.msra.mxu0 %v1019
      %1036 = vmatprep.subr.mxu0 0.0
      %1037 = vmatpush1.msra.mxu0 %v1018
      %1038 = vmatprep.subr.mxu0 0.0
      %1039 = vmatpush1.msra.mxu0 %v1017
      %1040 = vmatprep.subr.mxu0 0.0
      %1041 = vmatpush1.msra.mxu0 %v1016
      %1042 = vmatprep.subr.mxu0 0.0
      %1043 = vmatpush1.msra.mxu0 %v1015
      %1044 = vmatprep.subr.mxu0 0.0
      %1045 = vmatpush1.msra.mxu0 %v1014
      %1046 = vmatprep.subr.mxu0 0.0
      %1047 = vmatpush1.msra.mxu0 %v1013
      %1048 = vmatprep.subr.mxu0 0.0
      %1049 = vmatpush1.msra.mxu0 %v1012
      %1050 = vmatprep.subr.mxu0 0.0
      %1051 = vmatpush1.msra.mxu0 %v1011
      %1052 = vmatprep.subr.mxu0 0.0
      %1053 = vmatpush1.msra.mxu0 %v1010
      %1054 = vmatprep.subr.mxu0 0.0
      %1055 = vmatpush1.msra.mxu0 %v1009
      %1056 = vmatprep.subr.mxu0 0.0
      %1057 = vmatpush1.msra.mxu0 %v1008
      %1058 = vmatprep.subr.mxu0 0.0
      %1059 = vmatpush1.msra.mxu0 %v1007
      %1060 = vmatprep.subr.mxu0 0.0
      %1061 = vmatpush1.msra.mxu0 %v1006
      %1062 = vmatprep.subr.mxu0 0.0
      %1063 = vmatpush2.msra.mxu0 0.0
      %1064 = vmatprep.subr.mxu0 0.0
      %1065 = vmatpush2.msra.mxu0 0.0
      %1066 = vmatprep.subr.mxu0 0.0
      %1067 = vmatpush2.msra.mxu0 0.0
      %1068 = vmatprep.subr.mxu0 0.0
      %1069 = vmatpush2.msra.mxu0 0.0
      %1070 = vmatprep.subr.mxu0 0.0
      %1071 = vmatpush2.msra.mxu0 0.0
      %1072 = vmatprep.subr.mxu0 0.0
      %1073 = vmatpush2.msra.mxu0 0.0
      %1074 = vmatprep.subr.mxu0 0.0
      %1075 = vmatpush2.msra.mxu0 0.0
      %1076 = vmatprep.subr.mxu0 0.0
      %1077 = vmatpush2.msra.mxu0 0.0
      %1078 = vmatprep.subr.mxu0 0.0
      %1079 = vmatpush2.msra.mxu0 0.0
      %1080 = vmatprep.subr.mxu0 0.0
      %1081 = vmatpush2.msra.mxu0 0.0
      %1082 = vmatprep.subr.mxu0 0.0
      %1083 = vmatpush2.msra.mxu0 0.0
      %1084 = vmatprep.subr.mxu0 0.0
      %1085 = vmatpush2.msra.mxu0 0.0
      %1086 = vmatprep.subr.mxu0 0.0
      %1087 = vmatpush2.msra.mxu0 0.0
      %1088 = vmatprep.subr.mxu0 0.0
      %1089 = vmatpush2.msra.mxu0 0.0
      %1090 = vmatprep.subr.mxu0 0.0
      %1091 = vmatpush2.msra.mxu0 0.0
      %1092 = vmatprep.subr.mxu0 0.0
      %1093 = vmatpush2.msra.mxu0 0.0
      %1094 = vmatprep.mubr.f32.mxu0 0.0
      %1095 = vmatmul.mubr.f32.gmra.mxu0 %v997
      %v1096 = vpop.f32.mrf.mxu0
      %v1097 = vadd.f32 %v1028, %v1096
      %v1098 = vpop.f32.mrf.mxu0
      %1099 = vmatprep.mubr.f32.mxu0 0.0
      %1100 = vmatmul.mubr.f32.gmra.mxu0 %v998
      %v1101 = vpop.f32.mrf.mxu0
      %v1102 = vadd.f32 %v1028, %v1101
      %v1103 = vpop.f32.mrf.mxu0
      %1104 = vmatprep.mubr.f32.mxu0 0.0
      %1105 = vmatmul.mubr.f32.gmra.mxu0 %v999
      %v1106 = vpop.f32.mrf.mxu0
      %v1107 = vadd.f32 %v1028, %v1106
      %v1108 = vpop.f32.mrf.mxu0
      %1109 = vmatprep.mubr.f32.mxu0 0.0
      %1110 = vmatmul.mubr.f32.gmra.mxu0 %v1000
      %v1111 = vpop.f32.mrf.mxu0
      %v1112 = vadd.f32 %v1028, %v1111
      %v1113 = vpop.f32.mrf.mxu0
      %1114 = vmatprep.mubr.f32.mxu0 0.0
      %1115 = vmatmul.mubr.f32.gmra.mxu0 %v1001
      %v1116 = vpop.f32.mrf.mxu0
      %v1117 = vadd.f32 %v1028, %v1116
      %v1118 = vpop.f32.mrf.mxu0
      %1119 = vmatprep.mubr.f32.mxu0 0.0
      %1120 = vmatmul.mubr.f32.gmra.mxu0 %v1002
      %v1121 = vpop.f32.mrf.mxu0
      %v1122 = vadd.f32 %v1028, %v1121
      %v1123 = vpop.f32.mrf.mxu0
      %1124 = vmatprep.mubr.f32.mxu0 0.0
      %1125 = vmatmul.mubr.f32.gmra.mxu0 %v1003
      %v1126 = vpop.f32.mrf.mxu0
      %v1127 = vadd.f32 %v1028, %v1126
      %v1128 = vpop.f32.mrf.mxu0
      %1129 = vmatprep.mubr.f32.mxu0 0.0
      %1130 = vmatmul.mubr.f32.gmra.mxu0 %v1004
      %v1131 = vpop.f32.mrf.mxu0
      %v1132 = vadd.f32 %v1028, %v1131
      %v1133 = vpop.f32.mrf.mxu0
      %1134 = vdwg.mxu0
      %v1135 = vmax.f32 %v1097, 0.0
      %v1136 = vmax.f32 %v1102, 0.0
      %v1137 = vmax.f32 %v1107, 0.0
      %v1138 = vmax.f32 %v1112, 0.0
      %v1139 = vmax.f32 %v1117, 0.0
      %v1140 = vmax.f32 %v1122, 0.0
      %v1141 = vmax.f32 %v1127, 0.0
      %v1142 = vmax.f32 %v1132, 0.0
      %s1143 = scalar_lea.vmem %s1, 896
      %v1144 = vld [vmem:[%s1143] sm:$0xff]
      %v1145 = vld [vmem:[%s1143 + $0x8] sm:$0xff]
      %v1146 = vld [vmem:[%s1143 + $0x10] sm:$0xff]
      %v1147 = vld [vmem:[%s1143 + $0x18] sm:$0xff]
      %v1148 = vld [vmem:[%s1143 + $0x20] sm:$0xff]
      %v1149 = vld [vmem:[%s1143 + $0x28] sm:$0xff]
      %v1150 = vld [vmem:[%s1143 + $0x30] sm:$0xff]
      %v1151 = vld [vmem:[%s1143 + $0x38] sm:$0xff]
      %v1152 = vld [vmem:[%s1143 + $0x40] sm:$0xff]
      %v1153 = vld [vmem:[%s1143 + $0x48] sm:$0xff]
      %v1154 = vld [vmem:[%s1143 + $0x50] sm:$0xff]
      %v1155 = vld [vmem:[%s1143 + $0x58] sm:$0xff]
      %v1156 = vld [vmem:[%s1143 + $0x60] sm:$0xff]
      %v1157 = vld [vmem:[%s1143 + $0x68] sm:$0xff]
      %v1158 = vld [vmem:[%s1143 + $0x70] sm:$0xff]
      %v1159 = vld [vmem:[%s1143 + $0x78] sm:$0xff]
      %s1160 = scalar_lea.vmem %s2, 7
      %v1161 = vld [vmem:[%s1160] sm:$0x1]
      %v1163 = vlaneseq
      %v1164 = vshrl.u32 %v1163, 7
      %v1165 = vsub.s32 0, %v1164
      %v1166 = vrot.slane %v1161, %v1165
      %1168 = vmatprep.subr.mxu0 0.0
      %1169 = vmatpush1.msra.mxu0 %v1159
      %1170 = vmatprep.subr.mxu0 0.0
      %1171 = vmatpush1.msra.mxu0 %v1158
      %1172 = vmatprep.subr.mxu0 0.0
      %1173 = vmatpush1.msra.mxu0 %v1157
      %1174 = vmatprep.subr.mxu0 0.0
      %1175 = vmatpush1.msra.mxu0 %v1156
      %1176 = vmatprep.subr.mxu0 0.0
      %1177 = vmatpush1.msra.mxu0 %v1155
      %1178 = vmatprep.subr.mxu0 0.0
      %1179 = vmatpush1.msra.mxu0 %v1154
      %1180 = vmatprep.subr.mxu0 0.0
      %1181 = vmatpush1.msra.mxu0 %v1153
      %1182 = vmatprep.subr.mxu0 0.0
      %1183 = vmatpush1.msra.mxu0 %v1152
      %1184 = vmatprep.subr.mxu0 0.0
      %1185 = vmatpush1.msra.mxu0 %v1151
      %1186 = vmatprep.subr.mxu0 0.0
      %1187 = vmatpush1.msra.mxu0 %v1150
      %1188 = vmatprep.subr.mxu0 0.0
      %1189 = vmatpush1.msra.mxu0 %v1149
      %1190 = vmatprep.subr.mxu0 0.0
      %1191 = vmatpush1.msra.mxu0 %v1148
      %1192 = vmatprep.subr.mxu0 0.0
      %1193 = vmatpush1.msra.mxu0 %v1147
      %1194 = vmatprep.subr.mxu0 0.0
      %1195 = vmatpush1.msra.mxu0 %v1146
      %1196 = vmatprep.subr.mxu0 0.0
      %1197 = vmatpush1.msra.mxu0 %v1145
      %1198 = vmatprep.subr.mxu0 0.0
      %1199 = vmatpush1.msra.mxu0 %v1144
      %1200 = vmatprep.subr.mxu0 0.0
      %1201 = vmatpush2.msra.mxu0 0.0
      %1202 = vmatprep.subr.mxu0 0.0
      %1203 = vmatpush2.msra.mxu0 0.0
      %1204 = vmatprep.subr.mxu0 0.0
      %1205 = vmatpush2.msra.mxu0 0.0
      %1206 = vmatprep.subr.mxu0 0.0
      %1207 = vmatpush2.msra.mxu0 0.0
      %1208 = vmatprep.subr.mxu0 0.0
      %1209 = vmatpush2.msra.mxu0 0.0
      %1210 = vmatprep.subr.mxu0 0.0
      %1211 = vmatpush2.msra.mxu0 0.0
      %1212 = vmatprep.subr.mxu0 0.0
      %1213 = vmatpush2.msra.mxu0 0.0
      %1214 = vmatprep.subr.mxu0 0.0
      %1215 = vmatpush2.msra.mxu0 0.0
      %1216 = vmatprep.subr.mxu0 0.0
      %1217 = vmatpush2.msra.mxu0 0.0
      %1218 = vmatprep.subr.mxu0 0.0
      %1219 = vmatpush2.msra.mxu0 0.0
      %1220 = vmatprep.subr.mxu0 0.0
      %1221 = vmatpush2.msra.mxu0 0.0
      %1222 = vmatprep.subr.mxu0 0.0
      %1223 = vmatpush2.msra.mxu0 0.0
      %1224 = vmatprep.subr.mxu0 0.0
      %1225 = vmatpush2.msra.mxu0 0.0
      %1226 = vmatprep.subr.mxu0 0.0
      %1227 = vmatpush2.msra.mxu0 0.0
      %1228 = vmatprep.subr.mxu0 0.0
      %1229 = vmatpush2.msra.mxu0 0.0
      %1230 = vmatprep.subr.mxu0 0.0
      %1231 = vmatpush2.msra.mxu0 0.0
      %1232 = vmatprep.mubr.f32.mxu0 0.0
      %1233 = vmatmul.mubr.f32.gmra.mxu0 %v1135
      %v1234 = vpop.f32.mrf.mxu0
      %v1235 = vadd.f32 %v1166, %v1234
      %v1236 = vpop.f32.mrf.mxu0
      %1237 = vmatprep.mubr.f32.mxu0 0.0
      %1238 = vmatmul.mubr.f32.gmra.mxu0 %v1136
      %v1239 = vpop.f32.mrf.mxu0
      %v1240 = vadd.f32 %v1166, %v1239
      %v1241 = vpop.f32.mrf.mxu0
      %1242 = vmatprep.mubr.f32.mxu0 0.0
      %1243 = vmatmul.mubr.f32.gmra.mxu0 %v1137
      %v1244 = vpop.f32.mrf.mxu0
      %v1245 = vadd.f32 %v1166, %v1244
      %v1246 = vpop.f32.mrf.mxu0
      %1247 = vmatprep.mubr.f32.mxu0 0.0
      %1248 = vmatmul.mubr.f32.gmra.mxu0 %v1138
      %v1249 = vpop.f32.mrf.mxu0
      %v1250 = vadd.f32 %v1166, %v1249
      %v1251 = vpop.f32.mrf.mxu0
      %1252 = vmatprep.mubr.f32.mxu0 0.0
      %1253 = vmatmul.mubr.f32.gmra.mxu0 %v1139
      %v1254 = vpop.f32.mrf.mxu0
      %v1255 = vadd.f32 %v1166, %v1254
      %v1256 = vpop.f32.mrf.mxu0
      %1257 = vmatprep.mubr.f32.mxu0 0.0
      %1258 = vmatmul.mubr.f32.gmra.mxu0 %v1140
      %v1259 = vpop.f32.mrf.mxu0
      %v1260 = vadd.f32 %v1166, %v1259
      %v1261 = vpop.f32.mrf.mxu0
      %1262 = vmatprep.mubr.f32.mxu0 0.0
      %1263 = vmatmul.mubr.f32.gmra.mxu0 %v1141
      %v1264 = vpop.f32.mrf.mxu0
      %v1265 = vadd.f32 %v1166, %v1264
      %v1266 = vpop.f32.mrf.mxu0
      %1267 = vmatprep.mubr.f32.mxu0 0.0
      %1268 = vmatmul.mubr.f32.gmra.mxu0 %v1142
      %v1269 = vpop.f32.mrf.mxu0
      %v1270 = vadd.f32 %v1166, %v1269
      %v1271 = vpop.f32.mrf.mxu0
      %1272 = vdwg.mxu0
      %v1273 = vmax.f32 %v1235, 0.0
      %v1274 = vmax.f32 %v1240, 0.0
      %v1275 = vmax.f32 %v1245, 0.0
      %v1276 = vmax.f32 %v1250, 0.0
      %v1277 = vmax.f32 %v1255, 0.0
      %v1278 = vmax.f32 %v1260, 0.0
      %v1279 = vmax.f32 %v1265, 0.0
      %v1280 = vmax.f32 %v1270, 0.0
      %s1281 = scalar_lea.vmem %s1, 1024
      %v1282 = vld [vmem:[%s1281] sm:$0xff]
      %v1283 = vld [vmem:[%s1281 + $0x8] sm:$0xff]
      %v1284 = vld [vmem:[%s1281 + $0x10] sm:$0xff]
      %v1285 = vld [vmem:[%s1281 + $0x18] sm:$0xff]
      %v1286 = vld [vmem:[%s1281 + $0x20] sm:$0xff]
      %v1287 = vld [vmem:[%s1281 + $0x28] sm:$0xff]
      %v1288 = vld [vmem:[%s1281 + $0x30] sm:$0xff]
      %v1289 = vld [vmem:[%s1281 + $0x38] sm:$0xff]
      %v1290 = vld [vmem:[%s1281 + $0x40] sm:$0xff]
      %v1291 = vld [vmem:[%s1281 + $0x48] sm:$0xff]
      %v1292 = vld [vmem:[%s1281 + $0x50] sm:$0xff]
      %v1293 = vld [vmem:[%s1281 + $0x58] sm:$0xff]
      %v1294 = vld [vmem:[%s1281 + $0x60] sm:$0xff]
      %v1295 = vld [vmem:[%s1281 + $0x68] sm:$0xff]
      %v1296 = vld [vmem:[%s1281 + $0x70] sm:$0xff]
      %v1297 = vld [vmem:[%s1281 + $0x78] sm:$0xff]
      %s1298 = scalar_lea.vmem %s2, 8
      %v1299 = vld [vmem:[%s1298] sm:$0x1]
      %v1301 = vlaneseq
      %v1302 = vshrl.u32 %v1301, 7
      %v1303 = vsub.s32 0, %v1302
      %v1304 = vrot.slane %v1299, %v1303
      %1306 = vmatprep.subr.mxu0 0.0
      %1307 = vmatpush1.msra.mxu0 %v1297
      %1308 = vmatprep.subr.mxu0 0.0
      %1309 = vmatpush1.msra.mxu0 %v1296
      %1310 = vmatprep.subr.mxu0 0.0
      %1311 = vmatpush1.msra.mxu0 %v1295
      %1312 = vmatprep.subr.mxu0 0.0
      %1313 = vmatpush1.msra.mxu0 %v1294
      %1314 = vmatprep.subr.mxu0 0.0
      %1315 = vmatpush1.msra.mxu0 %v1293
      %1316 = vmatprep.subr.mxu0 0.0
      %1317 = vmatpush1.msra.mxu0 %v1292
      %1318 = vmatprep.subr.mxu0 0.0
      %1319 = vmatpush1.msra.mxu0 %v1291
      %1320 = vmatprep.subr.mxu0 0.0
      %1321 = vmatpush1.msra.mxu0 %v1290
      %1322 = vmatprep.subr.mxu0 0.0
      %1323 = vmatpush1.msra.mxu0 %v1289
      %1324 = vmatprep.subr.mxu0 0.0
      %1325 = vmatpush1.msra.mxu0 %v1288
      %1326 = vmatprep.subr.mxu0 0.0
      %1327 = vmatpush1.msra.mxu0 %v1287
      %1328 = vmatprep.subr.mxu0 0.0
      %1329 = vmatpush1.msra.mxu0 %v1286
      %1330 = vmatprep.subr.mxu0 0.0
      %1331 = vmatpush1.msra.mxu0 %v1285
      %1332 = vmatprep.subr.mxu0 0.0
      %1333 = vmatpush1.msra.mxu0 %v1284
      %1334 = vmatprep.subr.mxu0 0.0
      %1335 = vmatpush1.msra.mxu0 %v1283
      %1336 = vmatprep.subr.mxu0 0.0
      %1337 = vmatpush1.msra.mxu0 %v1282
      %1338 = vmatprep.subr.mxu0 0.0
      %1339 = vmatpush2.msra.mxu0 0.0
      %1340 = vmatprep.subr.mxu0 0.0
      %1341 = vmatpush2.msra.mxu0 0.0
      %1342 = vmatprep.subr.mxu0 0.0
      %1343 = vmatpush2.msra.mxu0 0.0
      %1344 = vmatprep.subr.mxu0 0.0
      %1345 = vmatpush2.msra.mxu0 0.0
      %1346 = vmatprep.subr.mxu0 0.0
      %1347 = vmatpush2.msra.mxu0 0.0
      %1348 = vmatprep.subr.mxu0 0.0
      %1349 = vmatpush2.msra.mxu0 0.0
      %1350 = vmatprep.subr.mxu0 0.0
      %1351 = vmatpush2.msra.mxu0 0.0
      %1352 = vmatprep.subr.mxu0 0.0
      %1353 = vmatpush2.msra.mxu0 0.0
      %1354 = vmatprep.subr.mxu0 0.0
      %1355 = vmatpush2.msra.mxu0 0.0
      %1356 = vmatprep.subr.mxu0 0.0
      %1357 = vmatpush2.msra.mxu0 0.0
      %1358 = vmatprep.subr.mxu0 0.0
      %1359 = vmatpush2.msra.mxu0 0.0
      %1360 = vmatprep.subr.mxu0 0.0
      %1361 = vmatpush2.msra.mxu0 0.0
      %1362 = vmatprep.subr.mxu0 0.0
      %1363 = vmatpush2.msra.mxu0 0.0
      %1364 = vmatprep.subr.mxu0 0.0
      %1365 = vmatpush2.msra.mxu0 0.0
      %1366 = vmatprep.subr.mxu0 0.0
      %1367 = vmatpush2.msra.mxu0 0.0
      %1368 = vmatprep.subr.mxu0 0.0
      %1369 = vmatpush2.msra.mxu0 0.0
      %1370 = vmatprep.mubr.f32.mxu0 0.0
      %1371 = vmatmul.mubr.f32.gmra.mxu0 %v1273
      %v1372 = vpop.f32.mrf.mxu0
      %v1373 = vadd.f32 %v1304, %v1372
      %v1374 = vpop.f32.mrf.mxu0
      %1375 = vmatprep.mubr.f32.mxu0 0.0
      %1376 = vmatmul.mubr.f32.gmra.mxu0 %v1274
      %v1377 = vpop.f32.mrf.mxu0
      %v1378 = vadd.f32 %v1304, %v1377
      %v1379 = vpop.f32.mrf.mxu0
      %1380 = vmatprep.mubr.f32.mxu0 0.0
      %1381 = vmatmul.mubr.f32.gmra.mxu0 %v1275
      %v1382 = vpop.f32.mrf.mxu0
      %v1383 = vadd.f32 %v1304, %v1382
      %v1384 = vpop.f32.mrf.mxu0
      %1385 = vmatprep.mubr.f32.mxu0 0.0
      %1386 = vmatmul.mubr.f32.gmra.mxu0 %v1276
      %v1387 = vpop.f32.mrf.mxu0
      %v1388 = vadd.f32 %v1304, %v1387
      %v1389 = vpop.f32.mrf.mxu0
      %1390 = vmatprep.mubr.f32.mxu0 0.0
      %1391 = vmatmul.mubr.f32.gmra.mxu0 %v1277
      %v1392 = vpop.f32.mrf.mxu0
      %v1393 = vadd.f32 %v1304, %v1392
      %v1394 = vpop.f32.mrf.mxu0
      %1395 = vmatprep.mubr.f32.mxu0 0.0
      %1396 = vmatmul.mubr.f32.gmra.mxu0 %v1278
      %v1397 = vpop.f32.mrf.mxu0
      %v1398 = vadd.f32 %v1304, %v1397
      %v1399 = vpop.f32.mrf.mxu0
      %1400 = vmatprep.mubr.f32.mxu0 0.0
      %1401 = vmatmul.mubr.f32.gmra.mxu0 %v1279
      %v1402 = vpop.f32.mrf.mxu0
      %v1403 = vadd.f32 %v1304, %v1402
      %v1404 = vpop.f32.mrf.mxu0
      %1405 = vmatprep.mubr.f32.mxu0 0.0
      %1406 = vmatmul.mubr.f32.gmra.mxu0 %v1280
      %v1407 = vpop.f32.mrf.mxu0
      %v1408 = vadd.f32 %v1304, %v1407
      %v1409 = vpop.f32.mrf.mxu0
      %1410 = vdwg.mxu0
      %v1411 = vmax.f32 %v1373, 0.0
      %v1412 = vmax.f32 %v1378, 0.0
      %v1413 = vmax.f32 %v1383, 0.0
      %v1414 = vmax.f32 %v1388, 0.0
      %v1415 = vmax.f32 %v1393, 0.0
      %v1416 = vmax.f32 %v1398, 0.0
      %v1417 = vmax.f32 %v1403, 0.0
      %v1418 = vmax.f32 %v1408, 0.0
      %s1419 = scalar_lea.vmem %s1, 1152
      %v1420 = vld [vmem:[%s1419] sm:$0xff]
      %v1421 = vld [vmem:[%s1419 + $0x8] sm:$0xff]
      %v1422 = vld [vmem:[%s1419 + $0x10] sm:$0xff]
      %v1423 = vld [vmem:[%s1419 + $0x18] sm:$0xff]
      %v1424 = vld [vmem:[%s1419 + $0x20] sm:$0xff]
      %v1425 = vld [vmem:[%s1419 + $0x28] sm:$0xff]
      %v1426 = vld [vmem:[%s1419 + $0x30] sm:$0xff]
      %v1427 = vld [vmem:[%s1419 + $0x38] sm:$0xff]
      %v1428 = vld [vmem:[%s1419 + $0x40] sm:$0xff]
      %v1429 = vld [vmem:[%s1419 + $0x48] sm:$0xff]
      %v1430 = vld [vmem:[%s1419 + $0x50] sm:$0xff]
      %v1431 = vld [vmem:[%s1419 + $0x58] sm:$0xff]
      %v1432 = vld [vmem:[%s1419 + $0x60] sm:$0xff]
      %v1433 = vld [vmem:[%s1419 + $0x68] sm:$0xff]
      %v1434 = vld [vmem:[%s1419 + $0x70] sm:$0xff]
      %v1435 = vld [vmem:[%s1419 + $0x78] sm:$0xff]
      %s1436 = scalar_lea.vmem %s2, 9
      %v1437 = vld [vmem:[%s1436] sm:$0x1]
      %v1439 = vlaneseq
      %v1440 = vshrl.u32 %v1439, 7
      %v1441 = vsub.s32 0, %v1440
      %v1442 = vrot.slane %v1437, %v1441
      %1444 = vmatprep.subr.mxu0 0.0
      %1445 = vmatpush1.msra.mxu0 %v1435
      %1446 = vmatprep.subr.mxu0 0.0
      %1447 = vmatpush1.msra.mxu0 %v1434
      %1448 = vmatprep.subr.mxu0 0.0
      %1449 = vmatpush1.msra.mxu0 %v1433
      %1450 = vmatprep.subr.mxu0 0.0
      %1451 = vmatpush1.msra.mxu0 %v1432
      %1452 = vmatprep.subr.mxu0 0.0
      %1453 = vmatpush1.msra.mxu0 %v1431
      %1454 = vmatprep.subr.mxu0 0.0
      %1455 = vmatpush1.msra.mxu0 %v1430
      %1456 = vmatprep.subr.mxu0 0.0
      %1457 = vmatpush1.msra.mxu0 %v1429
      %1458 = vmatprep.subr.mxu0 0.0
      %1459 = vmatpush1.msra.mxu0 %v1428
      %1460 = vmatprep.subr.mxu0 0.0
      %1461 = vmatpush1.msra.mxu0 %v1427
      %1462 = vmatprep.subr.mxu0 0.0
      %1463 = vmatpush1.msra.mxu0 %v1426
      %1464 = vmatprep.subr.mxu0 0.0
      %1465 = vmatpush1.msra.mxu0 %v1425
      %1466 = vmatprep.subr.mxu0 0.0
      %1467 = vmatpush1.msra.mxu0 %v1424
      %1468 = vmatprep.subr.mxu0 0.0
      %1469 = vmatpush1.msra.mxu0 %v1423
      %1470 = vmatprep.subr.mxu0 0.0
      %1471 = vmatpush1.msra.mxu0 %v1422
      %1472 = vmatprep.subr.mxu0 0.0
      %1473 = vmatpush1.msra.mxu0 %v1421
      %1474 = vmatprep.subr.mxu0 0.0
      %1475 = vmatpush1.msra.mxu0 %v1420
      %1476 = vmatprep.subr.mxu0 0.0
      %1477 = vmatpush2.msra.mxu0 0.0
      %1478 = vmatprep.subr.mxu0 0.0
      %1479 = vmatpush2.msra.mxu0 0.0
      %1480 = vmatprep.subr.mxu0 0.0
      %1481 = vmatpush2.msra.mxu0 0.0
      %1482 = vmatprep.subr.mxu0 0.0
      %1483 = vmatpush2.msra.mxu0 0.0
      %1484 = vmatprep.subr.mxu0 0.0
      %1485 = vmatpush2.msra.mxu0 0.0
      %1486 = vmatprep.subr.mxu0 0.0
      %1487 = vmatpush2.msra.mxu0 0.0
      %1488 = vmatprep.subr.mxu0 0.0
      %1489 = vmatpush2.msra.mxu0 0.0
      %1490 = vmatprep.subr.mxu0 0.0
      %1491 = vmatpush2.msra.mxu0 0.0
      %1492 = vmatprep.subr.mxu0 0.0
      %1493 = vmatpush2.msra.mxu0 0.0
      %1494 = vmatprep.subr.mxu0 0.0
      %1495 = vmatpush2.msra.mxu0 0.0
      %1496 = vmatprep.subr.mxu0 0.0
      %1497 = vmatpush2.msra.mxu0 0.0
      %1498 = vmatprep.subr.mxu0 0.0
      %1499 = vmatpush2.msra.mxu0 0.0
      %1500 = vmatprep.subr.mxu0 0.0
      %1501 = vmatpush2.msra.mxu0 0.0
      %1502 = vmatprep.subr.mxu0 0.0
      %1503 = vmatpush2.msra.mxu0 0.0
      %1504 = vmatprep.subr.mxu0 0.0
      %1505 = vmatpush2.msra.mxu0 0.0
      %1506 = vmatprep.subr.mxu0 0.0
      %1507 = vmatpush2.msra.mxu0 0.0
      %1508 = vmatprep.mubr.f32.mxu0 0.0
      %1509 = vmatmul.mubr.f32.gmra.mxu0 %v1411
      %v1510 = vpop.f32.mrf.mxu0
      %v1511 = vadd.f32 %v1442, %v1510
      %v1512 = vpop.f32.mrf.mxu0
      %1513 = vmatprep.mubr.f32.mxu0 0.0
      %1514 = vmatmul.mubr.f32.gmra.mxu0 %v1412
      %v1515 = vpop.f32.mrf.mxu0
      %v1516 = vadd.f32 %v1442, %v1515
      %v1517 = vpop.f32.mrf.mxu0
      %1518 = vmatprep.mubr.f32.mxu0 0.0
      %1519 = vmatmul.mubr.f32.gmra.mxu0 %v1413
      %v1520 = vpop.f32.mrf.mxu0
      %v1521 = vadd.f32 %v1442, %v1520
      %v1522 = vpop.f32.mrf.mxu0
      %1523 = vmatprep.mubr.f32.mxu0 0.0
      %1524 = vmatmul.mubr.f32.gmra.mxu0 %v1414
      %v1525 = vpop.f32.mrf.mxu0
      %v1526 = vadd.f32 %v1442, %v1525
      %v1527 = vpop.f32.mrf.mxu0
      %1528 = vmatprep.mubr.f32.mxu0 0.0
      %1529 = vmatmul.mubr.f32.gmra.mxu0 %v1415
      %v1530 = vpop.f32.mrf.mxu0
      %v1531 = vadd.f32 %v1442, %v1530
      %v1532 = vpop.f32.mrf.mxu0
      %1533 = vmatprep.mubr.f32.mxu0 0.0
      %1534 = vmatmul.mubr.f32.gmra.mxu0 %v1416
      %v1535 = vpop.f32.mrf.mxu0
      %v1536 = vadd.f32 %v1442, %v1535
      %v1537 = vpop.f32.mrf.mxu0
      %1538 = vmatprep.mubr.f32.mxu0 0.0
      %1539 = vmatmul.mubr.f32.gmra.mxu0 %v1417
      %v1540 = vpop.f32.mrf.mxu0
      %v1541 = vadd.f32 %v1442, %v1540
      %v1542 = vpop.f32.mrf.mxu0
      %1543 = vmatprep.mubr.f32.mxu0 0.0
      %1544 = vmatmul.mubr.f32.gmra.mxu0 %v1418
      %v1545 = vpop.f32.mrf.mxu0
      %v1546 = vadd.f32 %v1442, %v1545
      %v1547 = vpop.f32.mrf.mxu0
      %1548 = vdwg.mxu0
      %v1549 = vmax.f32 %v1511, 0.0
      %v1550 = vmax.f32 %v1516, 0.0
      %v1551 = vmax.f32 %v1521, 0.0
      %v1552 = vmax.f32 %v1526, 0.0
      %v1553 = vmax.f32 %v1531, 0.0
      %v1554 = vmax.f32 %v1536, 0.0
      %v1555 = vmax.f32 %v1541, 0.0
      %v1556 = vmax.f32 %v1546, 0.0
      %v1557 = vadd.f32 %v1549, %v1550
      %v1558 = vadd.f32 %v1557, %v1551
      %v1559 = vadd.f32 %v1558, %v1552
      %v1560 = vadd.f32 %v1559, %v1553
      %v1561 = vadd.f32 %v1560, %v1554
      %v1562 = vadd.f32 %v1561, %v1555
      %v1563 = vadd.f32 %v1562, %v1556
      %v1564 = vrot.slane %v1563, 4
      %v1565 = vadd.f32 %v1563, %v1564
      %v1566 = vrot.slane %v1565, 2
      %v1567 = vadd.f32 %v1565, %v1566
      %v1568 = vrot.slane %v1567, 1
      %v1569 = vadd.f32 %v1567, %v1568
      %v1570 = vmul.f32 %v1569, 0.015625
      %1571 = vst [vmem:[%s170] sm:$0xff] %v1570
      %p1572 = scmp.lt.s32.totalorder %s14, 1
      %s1573 = scalar_select %p1572, %s14, 1
      %s1574 = smul.addr %s1573, 8
      %s1575 = scalar_lea.vmem %s3, %s1574
      // Predicated region
      $region33: #{partial_model_forward.1} parent=31 // pred_check
        %p1576 = pneg %p100
      $region34: #{partial_model_forward.1} parent=31 // pred_check_branch
        %1578 = sbr.rel (%p1576) target = $region36
      $region35: #{partial_model_forward.1} parent=31 // pred_region
        _
      $region36: #{partial_model_forward.1} parent=31 // pred_fallthru
        _
    $region32: #{partial_model_forward.1} parent=5 // pred_fallthru
      _
    %p1579 = scmp.le.s32.totalorder 2, %s9
    // Predicated region
    $region37: #{partial_model_forward.1} parent=5 // pred_check
      %p1580 = pneg %p1579
    $region38: #{partial_model_forward.1} parent=5 // pred_check_branch
      %1582 = sbr.rel (%p1580) target = $region40
    $region39: #{partial_model_forward.1} parent=5 // pred_region
      %s1583 = ssub.s32 %s9, 2
      // Predicated region
      $region41: #{partial_model_forward.1} parent=39 // pred_check
        %p1584 = pneg %p106
      $region42: #{partial_model_forward.1} parent=39 // pred_check_branch
        %1586 = sbr.rel (%p1584) target = $region44
      $region43: #{partial_model_forward.1} parent=39 // pred_region
        %p1587 = scmp.lt.s32.totalorder %s15, 1
        %s1588 = scalar_select %p1587, %s15, 1
        %s1589 = smul.addr %s1588, 8
        %s1590 = scalar_lea.vmem %s3, %s1589
      $region44: #{partial_model_forward.1} parent=39 // pred_fallthru
        _
    $region40: #{partial_model_forward.1} parent=5 // pred_fallthru
      _
  $region6: #{partial_model_forward.1} parent=0 // loop_footer
    %s13 = sadd.s32 1, %s9
  $region7: #{partial_model_forward.1} parent=0 // loop_footer_branch
    %8 = sbr.rel target = $region3
  $region8: #{partial_model_forward.1} parent=0 // loop_exit
    _

</llo_original>
